<compile_context>
chip_gen: v5e
topology: v5e:2x2
jax: 0.10.0
libtpu: 0.0.40
codegen_flags: <defaults>
</compile_context>

<pallas_src>
import functools

import jax
import jax.numpy as jnp
import numpy as np
from jax import lax
from jax.experimental import pallas as pl
from jax.experimental.pallas import tpu as pltpu

EPS = 1e-5  # nn.BatchNorm2d default eps


# --------------------------------------------------------------------------- kernels
def _depthwise_folded(x_img, w_ref, cin):
    """3x3 depthwise conv, stride 1, zero pad 1, on a lane-folded image.

    x_img: (H, WCp) f32, lanes = (w, c) folded (pad lanes beyond W*Cin are zero).
    w_ref: (9, WCp) folded taps; W-boundary and pad lanes pre-zeroed in the wrapper.
    Returns (H, WCp) f32 depthwise output (conv bias omitted: cancels in train-BN).
    """
    h, wcp = x_img.shape
    row = lax.broadcasted_iota(jnp.int32, (h, 1), 0)
    acc = jnp.zeros((h, wcp), jnp.float32)
    for dy in range(3):
        # output row i takes input row i + dy - 1 (zero outside [0, H)): sublane roll
        # + row mask replaces an HBM-materialized padded image.
        xr = x_img if dy == 1 else pltpu.roll(x_img, (1 - dy) % h, axis=0)
        if dy == 0:
            xr = jnp.where(row >= 1, xr, 0.0)
        elif dy == 2:
            xr = jnp.where(row <= h - 2, xr, 0.0)
        for dx in range(3):
            # output col w takes input col w + dx - 1: lane roll by Cin (XLU slot);
            # wrapped boundary lanes are killed by the pre-zeroed tap weights.
            xs = xr if dx == 1 else pltpu.roll(xr, ((1 - dx) * cin) % wcp, axis=1)
            acc = acc + xs * w_ref[pl.ds(3 * dy + dx, 1), :]
    return acc


def _dw_stats_kernel(x_ref, w_ref, s_ref, *, cin):
    """Pass 1: depthwise conv -> per-(w,c)-column sum / sum-of-squares (BN1 partials)."""
    acc = _depthwise_folded(x_ref[0], w_ref, cin)
    s_ref[0, pl.ds(0, 1), :] = jnp.sum(acc, axis=0, keepdims=True)
    s_ref[0, pl.ds(1, 1), :] = jnp.sum(acc * acc, axis=0, keepdims=True)


def _bn1_pw_kernel(x_ref, w_ref, a1_ref, c1_ref, wpw_ref, y_ref, s_ref, *,
                   cin, use_relu6):
    """Pass 2: depthwise (recompute) + BN1 + ReLU6 + pointwise 1x1 + BN2 partials."""
    acc = _depthwise_folded(x_ref[0], w_ref, cin)
    h = acc * a1_ref[...] + c1_ref[...]
    h = jnp.clip(h, 0.0, 6.0) if use_relu6 else jnp.maximum(h, 0.0)
    # Pointwise conv as one MXU matmul vs. a block-diagonal folded weight: keeps the
    # folded lane layout, fixes the degenerate K=Cin MXU shape, output is lane-dense.
    y = jnp.dot(h.astype(jnp.bfloat16), wpw_ref[...],
                preferred_element_type=jnp.float32)
    y_ref[0] = y                                              # (H, W*Cout) lane-dense
    s_ref[0, pl.ds(0, 1), :] = jnp.sum(y, axis=0, keepdims=True)
    s_ref[0, pl.ds(1, 1), :] = jnp.sum(y * y, axis=0, keepdims=True)


def _bn2_act_kernel(y_ref, a2_ref, c2_ref, o_ref, *, use_relu6):
    """Pass 3: BN2 apply + ReLU6 on lane-dense whole-image blocks."""
    z = y_ref[...] * a2_ref[...] + c2_ref[...]
    o_ref[...] = jnp.clip(z, 0.0, 6.0) if use_relu6 else jnp.maximum(z, 0.0)


# --------------------------------------------------------------------------- helpers
def _vmem_limit_bytes():
    # Per-generation budget: <=~48 MiB on v7x (64 MiB physical), up to 100 MiB on
    # v5e/v6e (128 MiB physical).
    try:
        cap = int(pltpu.get_tpu_info().vmem_capacity_bytes)
    except Exception:  # non-TPU trace / older jax: conservative default
        cap = 64 * 1024 * 1024
    return min(cap * 3 // 4, 100 * 1024 * 1024)


def _scale_shift(stats, gamma, beta, count, groups, c):
    """(N, 2, groups*C) partial col sums -> per-channel BN scale/shift (train stats)."""
    tot = jnp.sum(stats, axis=0)[:, :groups * c].reshape(2, groups, c).sum(axis=1)
    mean = tot[0] / count
    # TODO(synk): E[x^2]-E[x]^2 in f32 cancels badly at production N*H*W; switch to
    # mean-shifted per-block partials (Welford merge) in this glue step if needed.
    var = tot[1] / count - mean * mean
    scale = gamma * lax.rsqrt(var + EPS)
    return scale, beta - mean * scale


# --------------------------------------------------------------------------- wrapper
@functools.partial(jax.jit, static_argnames=("stride", "use_relu6"))
def depthwise_sep_conv_block_nhwc(x, p, stride=1, use_relu6=True):
    """NHWC depthwise-separable block forward (train-mode BN), Pallas TPU kernels."""
    if stride != 1:
        # TODO(synk): stride=2 (the other MobileNetV1 case) needs an even/odd column
        # split of the folded lanes before the dx rolls; not implemented here.
        raise NotImplementedError("Pallas path implements stride=1 only.")
    N, H, W, Cin = x.shape
    Cout = p["w_pw"].shape[0]
    WCi, WCo = W * Cin, W * Cout
    WCp = ((WCi + 127) // 128) * 128        # lane width rounded to vreg lanes
    f32 = jnp.float32
    # TODO(synk): assumes H % 8 == 0 (true for MobileNet feature maps); otherwise pad H.
    # TODO(synk): for production H (>= ~64 rows) add a row-block grid axis with an
    # in-kernel halo DMA (manual make_async_copy) so the image need not be VMEM-
    # resident per n on v7x; at the demo sizes whole-image blocks are optimal.

    # Lane-folded image, no jnp.pad of the halo (saves an HBM round-trip). Production
    # W*Cin is normally 128-aligned, so the lane pad below is demo-only.
    xf = x.astype(f32).reshape(N, H, WCi)
    if WCp != WCi:
        xf = jnp.pad(xf, ((0, 0), (0, 0), (0, WCp - WCi)))

    # Depthwise taps folded across W; the W zero-pad boundary is baked in as zeroed
    # weight lanes (left column of dx=0 tap, right column of dx=2 tap).
    wdw = jnp.transpose(p["w_dw"][:, 0], (1, 2, 0)).astype(f32)          # (3, 3, Cin)
    taps = []
    for dy in range(3):
        for dx in range(3):
            v = jnp.tile(wdw[dy, dx], W)                                  # (W*Cin,)
            if dx == 0:
                v = v.at[:Cin].set(0.0)
            elif dx == 2:
                v = v.at[WCi - Cin:].set(0.0)
            if WCp != WCi:
                v = jnp.pad(v, (0, WCp - WCi))
            taps.append(v)
    wdw_fold = jnp.stack(taps)                                            # (9, WCp)

    # Block-diagonal folded pointwise weight; bf16 MXU operands, f32 accumulation.
    # Conv biases dropped: they cancel exactly under training-mode BN mean subtraction.
    wpw = jnp.transpose(p["w_pw"][:, :, 0, 0], (1, 0)).astype(f32)        # (Cin, Cout)
    wpw_fold = jnp.einsum("uv,io->uivo", jnp.eye(W, dtype=f32), wpw).reshape(WCi, WCo)
    if WCp != WCi:
        wpw_fold = jnp.pad(wpw_fold, ((0, WCp - WCi), (0, 0)))
    wpw_fold = wpw_fold.astype(jnp.bfloat16)
    # TODO(synk): the folded block-diagonal weight only makes sense for C < 128 layers;
    # for Cin/Cout >= 128 switch to the plain (Cin, Cout) matmul path.

    cparams = pltpu.CompilerParams(
        dimension_semantics=("parallel",),
        vmem_limit_bytes=_vmem_limit_bytes())

    # ---- pass 1: depthwise conv -> BN1 batch-stat partials (per image) ----
    stats1 = pl.pallas_call(
        functools.partial(_dw_stats_kernel, cin=Cin),
        out_shape=jax.ShapeDtypeStruct((N, 2, WCp), f32),
        grid=(N,),
        in_specs=[pl.BlockSpec((1, H, WCp), lambda n: (n, 0, 0)),
                  pl.BlockSpec((9, WCp), lambda n: (0, 0))],
        out_specs=pl.BlockSpec((1, 2, WCp), lambda n: (n, 0, 0)),
        compiler_params=cparams,
    )(xf, wdw_fold)

    count = float(N * H * W)  # stride 1: Ho=H, Wo=W
    a1, c1 = _scale_shift(stats1, p["g1"].astype(f32), p["be1"].astype(f32),
                          count, W, Cin)
    a1f = jnp.pad(jnp.tile(a1, W), (0, WCp - WCi)).reshape(1, WCp)
    c1f = jnp.pad(jnp.tile(c1, W), (0, WCp - WCi)).reshape(1, WCp)

    # ---- pass 2: depthwise (recompute) + BN1 + ReLU6 + pointwise + BN2 partials ----
    y_pre, stats2 = pl.pallas_call(
        functools.partial(_bn1_pw_kernel, cin=Cin, use_relu6=use_relu6),
        out_shape=(jax.ShapeDtypeStruct((N, H, WCo), f32),
                   jax.ShapeDtypeStruct((N, 2, WCo), f32)),
        grid=(N,),
        in_specs=[pl.BlockSpec((1, H, WCp), lambda n: (n, 0, 0)),
                  pl.BlockSpec((9, WCp), lambda n: (0, 0)),
                  pl.BlockSpec((1, WCp), lambda n: (0, 0)),
                  pl.BlockSpec((1, WCp), lambda n: (0, 0)),
                  pl.BlockSpec((WCp, WCo), lambda n: (0, 0))],
        out_specs=(pl.BlockSpec((1, H, WCo), lambda n: (n, 0, 0)),
                   pl.BlockSpec((1, 2, WCo), lambda n: (n, 0, 0))),
        compiler_params=cparams,
    )(xf, wdw_fold, a1f, c1f, wpw_fold)

    a2, c2 = _scale_shift(stats2, p["g2"].astype(f32), p["be2"].astype(f32),
                          count, W, Cout)
    a2f = jnp.tile(a2, W).reshape(1, 1, WCo)
    c2f = jnp.tile(c2, W).reshape(1, 1, WCo)

    # ---- pass 3: BN2 apply + ReLU6, lane-dense whole-image blocks ----
    out_f = pl.pallas_call(
        functools.partial(_bn2_act_kernel, use_relu6=use_relu6),
        out_shape=jax.ShapeDtypeStruct((N, H, WCo), f32),
        grid=(N,),
        in_specs=[pl.BlockSpec((1, H, WCo), lambda n: (n, 0, 0)),
                  pl.BlockSpec((1, 1, WCo), lambda n: (0, 0, 0)),
                  pl.BlockSpec((1, 1, WCo), lambda n: (0, 0, 0))],
        out_specs=pl.BlockSpec((1, H, WCo), lambda n: (n, 0, 0)),
        compiler_params=cparams,
    )(y_pre, a2f, c2f)

    # TODO(synk): BN running_mean/running_var momentum updates are stateful PyTorch
    # buffers and do not affect forward() output; not reproduced here.
    return out_f.reshape(N, H, W, Cout)


def depthwise_sep_conv_block(x_nchw, p, stride=1, use_relu6=True):
    """NCHW in/out wrapper (PyTorch convention). In a full network keep activations
    NHWC so these transposes happen once at the model boundary, not per block."""
    x = jnp.transpose(x_nchw, (0, 2, 3, 1))
    y = depthwise_sep_conv_block_nhwc(x, p, stride=stride, use_relu6=use_relu6)
    return jnp.transpose(y, (0, 3, 1, 2))


# --------------------------------------------------------------------------- reference
def _reference(x, p, stride=1):
    """Pure-JAX NCHW reference matching the PyTorch module in train mode (with biases)."""
    dn = ("NCHW", "OIHW", "NCHW")
    y = lax.conv_general_dilated(x, p["w_dw"], (stride, stride), ((1, 1), (1, 1)),
                                 dimension_numbers=dn, feature_group_count=x.shape[1])
    y = y + p["b_dw"][None, :, None, None]
    m = y.mean(axis=(0, 2, 3), keepdims=True)
    v = ((y - m) ** 2).mean(axis=(0, 2, 3), keepdims=True)
    y = (y - m) / jnp.sqrt(v + EPS) * p["g1"][None, :, None, None] + p["be1"][None, :, None, None]
    y = jnp.clip(y, 0.0, 6.0)

    z = lax.conv_general_dilated(y, p["w_pw"], (1, 1), "VALID", dimension_numbers=dn)
    z = z + p["b_pw"][None, :, None, None]
    m = z.mean(axis=(0, 2, 3), keepdims=True)
    v = ((z - m) ** 2).mean(axis=(0, 2, 3), keepdims=True)
    z = (z - m) / jnp.sqrt(v + EPS) * p["g2"][None, :, None, None] + p["be2"][None, :, None, None]
    return jnp.clip(z, 0.0, 6.0)


if __name__ == "__main__":
    N, Cin, Cout, H, W, stride = 2, 4, 8, 16, 16, 1

    key = jax.random.PRNGKey(0)
    ks = jax.random.split(key, 9)
    params = {
        # nn.Conv2d(Cin, Cin, 3, stride, padding=1, groups=Cin) -> (Cin, 1, 3, 3)
        "w_dw": 0.3 * jax.random.normal(ks[0], (Cin, 1, 3, 3), jnp.float32),
        "b_dw": 0.1 * jax.random.normal(ks[1], (Cin,), jnp.float32),
        # BatchNorm2d(Cin) affine params
        "g1": 1.0 + 0.1 * jax.random.normal(ks[2], (Cin,), jnp.float32),
        "be1": 0.1 * jax.random.normal(ks[3], (Cin,), jnp.float32),
        # nn.Conv2d(Cin, Cout, 1) -> (Cout, Cin, 1, 1)
        "w_pw": 0.3 * jax.random.normal(ks[4], (Cout, Cin, 1, 1), jnp.float32),
        "b_pw": 0.1 * jax.random.normal(ks[5], (Cout,), jnp.float32),
        # BatchNorm2d(Cout) affine params
        "g2": 1.0 + 0.1 * jax.random.normal(ks[6], (Cout,), jnp.float32),
        "be2": 0.1 * jax.random.normal(ks[7], (Cout,), jnp.float32),
    }
    x = jax.random.normal(ks[8], (N, Cin, H, W), jnp.float32)

    out = jax.block_until_ready(depthwise_sep_conv_block(x, params, stride=stride))
    ref = jax.block_until_ready(_reference(x, params, stride=stride))

    # bf16 MXU operands in the pointwise matmul -> slightly relaxed tolerance.
    np.testing.assert_allclose(np.asarray(out), np.asarray(ref), atol=2e-2, rtol=2e-2)

    print("KERNEL_OK")
</pallas_src>

<mosaic_0001>
module attributes {stable_mosaic.version = 11 : i64} {
  func.func @_dw_stats_kernel(%arg0: i32, %arg1: memref<1x16x128xf32, #tpu.memory_space<vmem>>, %arg2: memref<9x128xf32, #tpu.memory_space<vmem>>, %arg3: memref<1x2x128xf32, #tpu.memory_space<vmem>>) attributes {dimension_semantics = [#tpu.dimension_semantics<parallel>], iteration_bounds = array<i64: 2>, scalar_prefetch = 0 : i64, scratch_operands = 0 : i64, tpu.core_type = #tpu.core_type<tc>, window_params = [{transform_indices = @transform_0, window_bounds = array<i64: 1, 16, 128>}, {pipeline_mode = #tpu.pipeline_mode<synchronous>, transform_indices = @transform_1, window_bounds = array<i64: 9, 128>}, {transform_indices = @transform_2, window_bounds = array<i64: 1, 2, 128>}]} {
    %c0 = arith.constant 0 : index
    %c0_0 = arith.constant 0 : index
    %c0_1 = arith.constant 0 : index
    %0 = vector.load %arg1[%c0, %c0_0, %c0_1] : memref<1x16x128xf32, #tpu.memory_space<vmem>>, vector<1x16x128xf32>
    %1 = vector.shape_cast %0 : vector<1x16x128xf32> to vector<16x128xf32>
    %2 = tpu.iota {dimensions = array<i32: 0>} : vector<16x1xi32>
    %cst = arith.constant 0.000000e+00 : f32
    %3 = vector.broadcast %cst : f32 to vector<16x128xf32>
    %c1_i32 = arith.constant 1 : i32
    %4 = tpu.dynamic_rotate %1 by %c1_i32 dim 0 : vector<16x128xf32>, i32 -> vector<16x128xf32>
    %c1_i32_2 = arith.constant 1 : i32
    %5 = vector.broadcast %c1_i32_2 : i32 to vector<16x1xi32>
    %6 = arith.cmpi sge, %2, %5 : vector<16x1xi32>
    %cst_3 = arith.constant 0.000000e+00 : f32
    %7 = vector.shape_cast %6 : vector<16x1xi1> to vector<16x1xi1>
    %8 = vector.broadcast %7 : vector<16x1xi1> to vector<16x128xi1>
    %9 = vector.broadcast %cst_3 : f32 to vector<16x128xf32>
    %10 = arith.select %8, %4, %9 : vector<16x128xi1>, vector<16x128xf32>
    %c4_i32 = arith.constant 4 : i32
    %11 = tpu.dynamic_rotate %10 by %c4_i32 dim 1 : vector<16x128xf32>, i32 -> vector<16x128xf32>
    %c0_4 = arith.constant 0 : index
    %c0_5 = arith.constant 0 : index
    %12 = vector.load %arg2[%c0_4, %c0_5] : memref<9x128xf32, #tpu.memory_space<vmem>>, vector<1x128xf32>
    %13 = vector.broadcast %12 : vector<1x128xf32> to vector<16x128xf32>
    %14 = arith.mulf %11, %13 : vector<16x128xf32>
    %15 = arith.addf %3, %14 : vector<16x128xf32>
    %c1 = arith.constant 1 : index
    %c0_6 = arith.constant 0 : index
    %16 = vector.load %arg2[%c1, %c0_6] : memref<9x128xf32, #tpu.memory_space<vmem>>, vector<1x128xf32>
    %17 = vector.broadcast %16 : vector<1x128xf32> to vector<16x128xf32>
    %18 = arith.mulf %10, %17 : vector<16x128xf32>
    %19 = arith.addf %15, %18 : vector<16x128xf32>
    %c124_i32 = arith.constant 124 : i32
    %20 = tpu.dynamic_rotate %10 by %c124_i32 dim 1 : vector<16x128xf32>, i32 -> vector<16x128xf32>
    %c2 = arith.constant 2 : index
    %c0_7 = arith.constant 0 : index
    %21 = vector.load %arg2[%c2, %c0_7] : memref<9x128xf32, #tpu.memory_space<vmem>>, vector<1x128xf32>
    %22 = vector.broadcast %21 : vector<1x128xf32> to vector<16x128xf32>
    %23 = arith.mulf %20, %22 : vector<16x128xf32>
    %24 = arith.addf %19, %23 : vector<16x128xf32>
    %c4_i32_8 = arith.constant 4 : i32
    %25 = tpu.dynamic_rotate %1 by %c4_i32_8 dim 1 : vector<16x128xf32>, i32 -> vector<16x128xf32>
    %c3 = arith.constant 3 : index
    %c0_9 = arith.constant 0 : index
    %26 = vector.load %arg2[%c3, %c0_9] : memref<9x128xf32, #tpu.memory_space<vmem>>, vector<1x128xf32>
    %27 = vector.broadcast %26 : vector<1x128xf32> to vector<16x128xf32>
    %28 = arith.mulf %25, %27 : vector<16x128xf32>
    %29 = arith.addf %24, %28 : vector<16x128xf32>
    %c4 = arith.constant 4 : index
    %c0_10 = arith.constant 0 : index
    %30 = vector.load %arg2[%c4, %c0_10] : memref<9x128xf32, #tpu.memory_space<vmem>>, vector<1x128xf32>
    %31 = vector.broadcast %30 : vector<1x128xf32> to vector<16x128xf32>
    %32 = arith.mulf %1, %31 : vector<16x128xf32>
    %33 = arith.addf %29, %32 : vector<16x128xf32>
    %c124_i32_11 = arith.constant 124 : i32
    %34 = tpu.dynamic_rotate %1 by %c124_i32_11 dim 1 : vector<16x128xf32>, i32 -> vector<16x128xf32>
    %c5 = arith.constant 5 : index
    %c0_12 = arith.constant 0 : index
    %35 = vector.load %arg2[%c5, %c0_12] : memref<9x128xf32, #tpu.memory_space<vmem>>, vector<1x128xf32>
    %36 = vector.broadcast %35 : vector<1x128xf32> to vector<16x128xf32>
    %37 = arith.mulf %34, %36 : vector<16x128xf32>
    %38 = arith.addf %33, %37 : vector<16x128xf32>
    %c15_i32 = arith.constant 15 : i32
    %39 = tpu.dynamic_rotate %1 by %c15_i32 dim 0 : vector<16x128xf32>, i32 -> vector<16x128xf32>
    %c14_i32 = arith.constant 14 : i32
    %40 = vector.broadcast %c14_i32 : i32 to vector<16x1xi32>
    %41 = arith.cmpi sle, %2, %40 : vector<16x1xi32>
    %cst_13 = arith.constant 0.000000e+00 : f32
    %42 = vector.shape_cast %41 : vector<16x1xi1> to vector<16x1xi1>
    %43 = vector.broadcast %42 : vector<16x1xi1> to vector<16x128xi1>
    %44 = vector.broadcast %cst_13 : f32 to vector<16x128xf32>
    %45 = arith.select %43, %39, %44 : vector<16x128xi1>, vector<16x128xf32>
    %c4_i32_14 = arith.constant 4 : i32
    %46 = tpu.dynamic_rotate %45 by %c4_i32_14 dim 1 : vector<16x128xf32>, i32 -> vector<16x128xf32>
    %c6 = arith.constant 6 : index
    %c0_15 = arith.constant 0 : index
    %47 = vector.load %arg2[%c6, %c0_15] : memref<9x128xf32, #tpu.memory_space<vmem>>, vector<1x128xf32>
    %48 = vector.broadcast %47 : vector<1x128xf32> to vector<16x128xf32>
    %49 = arith.mulf %46, %48 : vector<16x128xf32>
    %50 = arith.addf %38, %49 : vector<16x128xf32>
    %c7 = arith.constant 7 : index
    %c0_16 = arith.constant 0 : index
    %51 = vector.load %arg2[%c7, %c0_16] : memref<9x128xf32, #tpu.memory_space<vmem>>, vector<1x128xf32>
    %52 = vector.broadcast %51 : vector<1x128xf32> to vector<16x128xf32>
    %53 = arith.mulf %45, %52 : vector<16x128xf32>
    %54 = arith.addf %50, %53 : vector<16x128xf32>
    %c124_i32_17 = arith.constant 124 : i32
    %55 = tpu.dynamic_rotate %45 by %c124_i32_17 dim 1 : vector<16x128xf32>, i32 -> vector<16x128xf32>
    %c8 = arith.constant 8 : index
    %c0_18 = arith.constant 0 : index
    %56 = vector.load %arg2[%c8, %c0_18] : memref<9x128xf32, #tpu.memory_space<vmem>>, vector<1x128xf32>
    %57 = vector.broadcast %56 : vector<1x128xf32> to vector<16x128xf32>
    %58 = arith.mulf %55, %57 : vector<16x128xf32>
    %59 = arith.addf %54, %58 : vector<16x128xf32>
    %cst_19 = arith.constant dense<0.000000e+00> : vector<128xf32>
    %60 = vector.multi_reduction <add>, %59, %cst_19 [0] : vector<16x128xf32> to vector<128xf32>
    %61 = vector.shape_cast %60 : vector<128xf32> to vector<1x128xf32>
    %c0_20 = arith.constant 0 : index
    %c0_21 = arith.constant 0 : index
    %c0_22 = arith.constant 0 : index
    %62 = vector.load %arg3[%c0_20, %c0_21, %c0_22] : memref<1x2x128xf32, #tpu.memory_space<vmem>>, vector<1x1x128xf32>
    %63 = vector.shape_cast %62 : vector<1x1x128xf32> to vector<1x128xf32>
    %64 = vector.shape_cast %61 : vector<1x128xf32> to vector<1x1x128xf32>
    tpu.vector_store %arg3[%c0_20, %c0_21, %c0_22], %64 {strides = array<i32>} : memref<1x2x128xf32, #tpu.memory_space<vmem>>, vector<1x1x128xf32>,
    %65 = arith.mulf %59, %59 : vector<16x128xf32>
    %cst_23 = arith.constant dense<0.000000e+00> : vector<128xf32>
    %66 = vector.multi_reduction <add>, %65, %cst_23 [0] : vector<16x128xf32> to vector<128xf32>
    %67 = vector.shape_cast %66 : vector<128xf32> to vector<1x128xf32>
    %c0_24 = arith.constant 0 : index
    %c1_25 = arith.constant 1 : index
    %c0_26 = arith.constant 0 : index
    %68 = vector.load %arg3[%c0_24, %c1_25, %c0_26] : memref<1x2x128xf32, #tpu.memory_space<vmem>>, vector<1x1x128xf32>
    %69 = vector.shape_cast %68 : vector<1x1x128xf32> to vector<1x128xf32>
    %70 = vector.shape_cast %67 : vector<1x128xf32> to vector<1x1x128xf32>
    tpu.vector_store %arg3[%c0_24, %c1_25, %c0_26], %70 {strides = array<i32>} : memref<1x2x128xf32, #tpu.memory_space<vmem>>, vector<1x1x128xf32>,
    return
  }
  func.func @transform_0(%arg0: i32) -> (i32, i32, i32) {
    %c0_i32 = arith.constant 0 : i32
    %c0_i32_0 = arith.constant 0 : i32
    %c0_i32_1 = arith.constant 0 : i32
    return %arg0, %c0_i32, %c0_i32_0 : i32, i32, i32
  }
  func.func @transform_1(%arg0: i32) -> (i32, i32) {
    %c0_i32 = arith.constant 0 : i32
    %c0_i32_0 = arith.constant 0 : i32
    %c0_i32_1 = arith.constant 0 : i32
    return %c0_i32, %c0_i32_0 : i32, i32
  }
  func.func @transform_2(%arg0: i32) -> (i32, i32, i32) {
    %c0_i32 = arith.constant 0 : i32
    %c0_i32_0 = arith.constant 0 : i32
    %c0_i32_1 = arith.constant 0 : i32
    return %arg0, %c0_i32, %c0_i32_0 : i32, i32, i32
  }
}

module attributes {stable_mosaic.version = 11 : i64} {
  func.func @_bn1_pw_kernel(%arg0: i32, %arg1: memref<1x16x128xf32, #tpu.memory_space<vmem>>, %arg2: memref<9x128xf32, #tpu.memory_space<vmem>>, %arg3: memref<1x128xf32, #tpu.memory_space<vmem>>, %arg4: memref<1x128xf32, #tpu.memory_space<vmem>>, %arg5: memref<128x128xbf16, #tpu.memory_space<vmem>>, %arg6: memref<1x16x128xf32, #tpu.memory_space<vmem>>, %arg7: memref<1x2x128xf32, #tpu.memory_space<vmem>>) attributes {dimension_semantics = [#tpu.dimension_semantics<parallel>], iteration_bounds = array<i64: 2>, scalar_prefetch = 0 : i64, scratch_operands = 0 : i64, tpu.core_type = #tpu.core_type<tc>, window_params = [{transform_indices = @transform_0, window_bounds = array<i64: 1, 16, 128>}, {pipeline_mode = #tpu.pipeline_mode<synchronous>, transform_indices = @transform_1, window_bounds = array<i64: 9, 128>}, {pipeline_mode = #tpu.pipeline_mode<synchronous>, transform_indices = @transform_2, window_bounds = array<i64: 1, 128>}, {pipeline_mode = #tpu.pipeline_mode<synchronous>, transform_indices = @transform_3, window_bounds = array<i64: 1, 128>}, {pipeline_mode = #tpu.pipeline_mode<synchronous>, transform_indices = @transform_4, window_bounds = array<i64: 128, 128>}, {transform_indices = @transform_5, window_bounds = array<i64: 1, 16, 128>}, {transform_indices = @transform_6, window_bounds = array<i64: 1, 2, 128>}]} {
    %c0 = arith.constant 0 : index
    %c0_0 = arith.constant 0 : index
    %c0_1 = arith.constant 0 : index
    %0 = vector.load %arg1[%c0, %c0_0, %c0_1] : memref<1x16x128xf32, #tpu.memory_space<vmem>>, vector<1x16x128xf32>
    %1 = vector.shape_cast %0 : vector<1x16x128xf32> to vector<16x128xf32>
    %2 = tpu.iota {dimensions = array<i32: 0>} : vector<16x1xi32>
    %cst = arith.constant 0.000000e+00 : f32
    %3 = vector.broadcast %cst : f32 to vector<16x128xf32>
    %c1_i32 = arith.constant 1 : i32
    %4 = tpu.dynamic_rotate %1 by %c1_i32 dim 0 : vector<16x128xf32>, i32 -> vector<16x128xf32>
    %c1_i32_2 = arith.constant 1 : i32
    %5 = vector.broadcast %c1_i32_2 : i32 to vector<16x1xi32>
    %6 = arith.cmpi sge, %2, %5 : vector<16x1xi32>
    %cst_3 = arith.constant 0.000000e+00 : f32
    %7 = vector.shape_cast %6 : vector<16x1xi1> to vector<16x1xi1>
    %8 = vector.broadcast %7 : vector<16x1xi1> to vector<16x128xi1>
    %9 = vector.broadcast %cst_3 : f32 to vector<16x128xf32>
    %10 = arith.select %8, %4, %9 : vector<16x128xi1>, vector<16x128xf32>
    %c4_i32 = arith.constant 4 : i32
    %11 = tpu.dynamic_rotate %10 by %c4_i32 dim 1 : vector<16x128xf32>, i32 -> vector<16x128xf32>
    %c0_4 = arith.constant 0 : index
    %c0_5 = arith.constant 0 : index
    %12 = vector.load %arg2[%c0_4, %c0_5] : memref<9x128xf32, #tpu.memory_space<vmem>>, vector<1x128xf32>
    %13 = vector.broadcast %12 : vector<1x128xf32> to vector<16x128xf32>
    %14 = arith.mulf %11, %13 : vector<16x128xf32>
    %15 = arith.addf %3, %14 : vector<16x128xf32>
    %c1 = arith.constant 1 : index
    %c0_6 = arith.constant 0 : index
    %16 = vector.load %arg2[%c1, %c0_6] : memref<9x128xf32, #tpu.memory_space<vmem>>, vector<1x128xf32>
    %17 = vector.broadcast %16 : vector<1x128xf32> to vector<16x128xf32>
    %18 = arith.mulf %10, %17 : vector<16x128xf32>
    %19 = arith.addf %15, %18 : vector<16x128xf32>
    %c124_i32 = arith.constant 124 : i32
    %20 = tpu.dynamic_rotate %10 by %c124_i32 dim 1 : vector<16x128xf32>, i32 -> vector<16x128xf32>
    %c2 = arith.constant 2 : index
    %c0_7 = arith.constant 0 : index
    %21 = vector.load %arg2[%c2, %c0_7] : memref<9x128xf32, #tpu.memory_space<vmem>>, vector<1x128xf32>
    %22 = vector.broadcast %21 : vector<1x128xf32> to vector<16x128xf32>
    %23 = arith.mulf %20, %22 : vector<16x128xf32>
    %24 = arith.addf %19, %23 : vector<16x128xf32>
    %c4_i32_8 = arith.constant 4 : i32
    %25 = tpu.dynamic_rotate %1 by %c4_i32_8 dim 1 : vector<16x128xf32>, i32 -> vector<16x128xf32>
    %c3 = arith.constant 3 : index
    %c0_9 = arith.constant 0 : index
    %26 = vector.load %arg2[%c3, %c0_9] : memref<9x128xf32, #tpu.memory_space<vmem>>, vector<1x128xf32>
    %27 = vector.broadcast %26 : vector<1x128xf32> to vector<16x128xf32>
    %28 = arith.mulf %25, %27 : vector<16x128xf32>
    %29 = arith.addf %24, %28 : vector<16x128xf32>
    %c4 = arith.constant 4 : index
    %c0_10 = arith.constant 0 : index
    %30 = vector.load %arg2[%c4, %c0_10] : memref<9x128xf32, #tpu.memory_space<vmem>>, vector<1x128xf32>
    %31 = vector.broadcast %30 : vector<1x128xf32> to vector<16x128xf32>
    %32 = arith.mulf %1, %31 : vector<16x128xf32>
    %33 = arith.addf %29, %32 : vector<16x128xf32>
    %c124_i32_11 = arith.constant 124 : i32
    %34 = tpu.dynamic_rotate %1 by %c124_i32_11 dim 1 : vector<16x128xf32>, i32 -> vector<16x128xf32>
    %c5 = arith.constant 5 : index
    %c0_12 = arith.constant 0 : index
    %35 = vector.load %arg2[%c5, %c0_12] : memref<9x128xf32, #tpu.memory_space<vmem>>, vector<1x128xf32>
    %36 = vector.broadcast %35 : vector<1x128xf32> to vector<16x128xf32>
    %37 = arith.mulf %34, %36 : vector<16x128xf32>
    %38 = arith.addf %33, %37 : vector<16x128xf32>
    %c15_i32 = arith.constant 15 : i32
    %39 = tpu.dynamic_rotate %1 by %c15_i32 dim 0 : vector<16x128xf32>, i32 -> vector<16x128xf32>
    %c14_i32 = arith.constant 14 : i32
    %40 = vector.broadcast %c14_i32 : i32 to vector<16x1xi32>
    %41 = arith.cmpi sle, %2, %40 : vector<16x1xi32>
    %cst_13 = arith.constant 0.000000e+00 : f32
    %42 = vector.shape_cast %41 : vector<16x1xi1> to vector<16x1xi1>
    %43 = vector.broadcast %42 : vector<16x1xi1> to vector<16x128xi1>
    %44 = vector.broadcast %cst_13 : f32 to vector<16x128xf32>
    %45 = arith.select %43, %39, %44 : vector<16x128xi1>, vector<16x128xf32>
    %c4_i32_14 = arith.constant 4 : i32
    %46 = tpu.dynamic_rotate %45 by %c4_i32_14 dim 1 : vector<16x128xf32>, i32 -> vector<16x128xf32>
    %c6 = arith.constant 6 : index
    %c0_15 = arith.constant 0 : index
    %47 = vector.load %arg2[%c6, %c0_15] : memref<9x128xf32, #tpu.memory_space<vmem>>, vector<1x128xf32>
    %48 = vector.broadcast %47 : vector<1x128xf32> to vector<16x128xf32>
    %49 = arith.mulf %46, %48 : vector<16x128xf32>
    %50 = arith.addf %38, %49 : vector<16x128xf32>
    %c7 = arith.constant 7 : index
    %c0_16 = arith.constant 0 : index
    %51 = vector.load %arg2[%c7, %c0_16] : memref<9x128xf32, #tpu.memory_space<vmem>>, vector<1x128xf32>
    %52 = vector.broadcast %51 : vector<1x128xf32> to vector<16x128xf32>
    %53 = arith.mulf %45, %52 : vector<16x128xf32>
    %54 = arith.addf %50, %53 : vector<16x128xf32>
    %c124_i32_17 = arith.constant 124 : i32
    %55 = tpu.dynamic_rotate %45 by %c124_i32_17 dim 1 : vector<16x128xf32>, i32 -> vector<16x128xf32>
    %c8 = arith.constant 8 : index
    %c0_18 = arith.constant 0 : index
    %56 = vector.load %arg2[%c8, %c0_18] : memref<9x128xf32, #tpu.memory_space<vmem>>, vector<1x128xf32>
    %57 = vector.broadcast %56 : vector<1x128xf32> to vector<16x128xf32>
    %58 = arith.mulf %55, %57 : vector<16x128xf32>
    %59 = arith.addf %54, %58 : vector<16x128xf32>
    %c0_19 = arith.constant 0 : index
    %c0_20 = arith.constant 0 : index
    %60 = vector.load %arg3[%c0_19, %c0_20] : memref<1x128xf32, #tpu.memory_space<vmem>>, vector<1x128xf32>
    %61 = vector.broadcast %60 : vector<1x128xf32> to vector<16x128xf32>
    %62 = arith.mulf %59, %61 : vector<16x128xf32>
    %c0_21 = arith.constant 0 : index
    %c0_22 = arith.constant 0 : index
    %63 = vector.load %arg4[%c0_21, %c0_22] : memref<1x128xf32, #tpu.memory_space<vmem>>, vector<1x128xf32>
    %64 = vector.broadcast %63 : vector<1x128xf32> to vector<16x128xf32>
    %65 = arith.addf %62, %64 : vector<16x128xf32>
    %cst_23 = arith.constant 0.000000e+00 : f32
    %cst_24 = arith.constant 6.000000e+00 : f32
    %66 = vector.broadcast %cst_23 : f32 to vector<16x128xf32>
    %67 = arith.maximumf %66, %65 : vector<16x128xf32>
    %68 = vector.broadcast %cst_24 : f32 to vector<16x128xf32>
    %69 = arith.minimumf %68, %67 : vector<16x128xf32>
    %70 = arith.truncf %69 : vector<16x128xf32> to vector<16x128xbf16>
    %c0_25 = arith.constant 0 : index
    %c0_26 = arith.constant 0 : index
    %71 = vector.load %arg5[%c0_25, %c0_26] : memref<128x128xbf16, #tpu.memory_space<vmem>>, vector<128x128xbf16>
    %cst_27 = arith.constant dense<0.000000e+00> : vector<16x128xf32>
    %72 = tpu.matmul %70, %71, %cst_27 {dimension_numbers = #tpu.dot_dimension_numbers<[1], [0], [0], [1], [0, 0, 1, 1], [], []>} : vector<16x128xbf16>, vector<128x128xbf16>, vector<16x128xf32> -> vector<16x128xf32>
    %c0_28 = arith.constant 0 : index
    %c0_29 = arith.constant 0 : index
    %c0_30 = arith.constant 0 : index
    %73 = vector.load %arg6[%c0_28, %c0_29, %c0_30] : memref<1x16x128xf32, #tpu.memory_space<vmem>>, vector<1x16x128xf32>
    %74 = vector.shape_cast %73 : vector<1x16x128xf32> to vector<16x128xf32>
    %75 = vector.shape_cast %72 : vector<16x128xf32> to vector<1x16x128xf32>
    tpu.vector_store %arg6[%c0_28, %c0_29, %c0_30], %75 {strides = array<i32>} : memref<1x16x128xf32, #tpu.memory_space<vmem>>, vector<1x16x128xf32>,
    %cst_31 = arith.constant dense<0.000000e+00> : vector<128xf32>
    %76 = vector.multi_reduction <add>, %72, %cst_31 [0] : vector<16x128xf32> to vector<128xf32>
    %77 = vector.shape_cast %76 : vector<128xf32> to vector<1x128xf32>
    %c0_32 = arith.constant 0 : index
    %c0_33 = arith.constant 0 : index
    %c0_34 = arith.constant 0 : index
    %78 = vector.load %arg7[%c0_32, %c0_33, %c0_34] : memref<1x2x128xf32, #tpu.memory_space<vmem>>, vector<1x1x128xf32>
    %79 = vector.shape_cast %78 : vector<1x1x128xf32> to vector<1x128xf32>
    %80 = vector.shape_cast %77 : vector<1x128xf32> to vector<1x1x128xf32>
    tpu.vector_store %arg7[%c0_32, %c0_33, %c0_34], %80 {strides = array<i32>} : memref<1x2x128xf32, #tpu.memory_space<vmem>>, vector<1x1x128xf32>,
    %81 = arith.mulf %72, %72 : vector<16x128xf32>
    %cst_35 = arith.constant dense<0.000000e+00> : vector<128xf32>
    %82 = vector.multi_reduction <add>, %81, %cst_35 [0] : vector<16x128xf32> to vector<128xf32>
    %83 = vector.shape_cast %82 : vector<128xf32> to vector<1x128xf32>
    %c0_36 = arith.constant 0 : index
    %c1_37 = arith.constant 1 : index
    %c0_38 = arith.constant 0 : index
    %84 = vector.load %arg7[%c0_36, %c1_37, %c0_38] : memref<1x2x128xf32, #tpu.memory_space<vmem>>, vector<1x1x128xf32>
    %85 = vector.shape_cast %84 : vector<1x1x128xf32> to vector<1x128xf32>
    %86 = vector.shape_cast %83 : vector<1x128xf32> to vector<1x1x128xf32>
    tpu.vector_store %arg7[%c0_36, %c1_37, %c0_38], %86 {strides = array<i32>} : memref<1x2x128xf32, #tpu.memory_space<vmem>>, vector<1x1x128xf32>,
    return
  }
  func.func @transform_0(%arg0: i32) -> (i32, i32, i32) {
    %c0_i32 = arith.constant 0 : i32
    %c0_i32_0 = arith.constant 0 : i32
    %c0_i32_1 = arith.constant 0 : i32
    return %arg0, %c0_i32, %c0_i32_0 : i32, i32, i32
  }
  func.func @transform_1(%arg0: i32) -> (i32, i32) {
    %c0_i32 = arith.constant 0 : i32
    %c0_i32_0 = arith.constant 0 : i32
    %c0_i32_1 = arith.constant 0 : i32
    return %c0_i32, %c0_i32_0 : i32, i32
  }
  func.func @transform_2(%arg0: i32) -> (i32, i32) {
    %c0_i32 = arith.constant 0 : i32
    %c0_i32_0 = arith.constant 0 : i32
    %c0_i32_1 = arith.constant 0 : i32
    return %c0_i32, %c0_i32_0 : i32, i32
  }
  func.func @transform_3(%arg0: i32) -> (i32, i32) {
    %c0_i32 = arith.constant 0 : i32
    %c0_i32_0 = arith.constant 0 : i32
    %c0_i32_1 = arith.constant 0 : i32
    return %c0_i32, %c0_i32_0 : i32, i32
  }
  func.func @transform_4(%arg0: i32) -> (i32, i32) {
    %c0_i32 = arith.constant 0 : i32
    %c0_i32_0 = arith.constant 0 : i32
    %c0_i32_1 = arith.constant 0 : i32
    return %c0_i32, %c0_i32_0 : i32, i32
  }
  func.func @transform_5(%arg0: i32) -> (i32, i32, i32) {
    %c0_i32 = arith.constant 0 : i32
    %c0_i32_0 = arith.constant 0 : i32
    %c0_i32_1 = arith.constant 0 : i32
    return %arg0, %c0_i32, %c0_i32_0 : i32, i32, i32
  }
  func.func @transform_6(%arg0: i32) -> (i32, i32, i32) {
    %c0_i32 = arith.constant 0 : i32
    %c0_i32_0 = arith.constant 0 : i32
    %c0_i32_1 = arith.constant 0 : i32
    return %arg0, %c0_i32, %c0_i32_0 : i32, i32, i32
  }
}

module attributes {stable_mosaic.version = 11 : i64} {
  func.func @_bn2_act_kernel(%arg0: i32, %arg1: memref<1x16x128xf32, #tpu.memory_space<vmem>>, %arg2: memref<1x1x128xf32, #tpu.memory_space<vmem>>, %arg3: memref<1x1x128xf32, #tpu.memory_space<vmem>>, %arg4: memref<1x16x128xf32, #tpu.memory_space<vmem>>) attributes {dimension_semantics = [#tpu.dimension_semantics<parallel>], iteration_bounds = array<i64: 2>, scalar_prefetch = 0 : i64, scratch_operands = 0 : i64, tpu.core_type = #tpu.core_type<tc>, window_params = [{transform_indices = @transform_0, window_bounds = array<i64: 1, 16, 128>}, {pipeline_mode = #tpu.pipeline_mode<synchronous>, transform_indices = @transform_1, window_bounds = array<i64: 1, 1, 128>}, {pipeline_mode = #tpu.pipeline_mode<synchronous>, transform_indices = @transform_2, window_bounds = array<i64: 1, 1, 128>}, {transform_indices = @transform_3, window_bounds = array<i64: 1, 16, 128>}]} {
    %c0 = arith.constant 0 : index
    %c0_0 = arith.constant 0 : index
    %c0_1 = arith.constant 0 : index
    %0 = vector.load %arg1[%c0, %c0_0, %c0_1] : memref<1x16x128xf32, #tpu.memory_space<vmem>>, vector<1x16x128xf32>
    %c0_2 = arith.constant 0 : index
    %c0_3 = arith.constant 0 : index
    %c0_4 = arith.constant 0 : index
    %1 = vector.load %arg2[%c0_2, %c0_3, %c0_4] : memref<1x1x128xf32, #tpu.memory_space<vmem>>, vector<1x1x128xf32>
    %2 = vector.broadcast %1 : vector<1x1x128xf32> to vector<1x16x128xf32>
    %3 = arith.mulf %0, %2 : vector<1x16x128xf32>
    %c0_5 = arith.constant 0 : index
    %c0_6 = arith.constant 0 : index
    %c0_7 = arith.constant 0 : index
    %4 = vector.load %arg3[%c0_5, %c0_6, %c0_7] : memref<1x1x128xf32, #tpu.memory_space<vmem>>, vector<1x1x128xf32>
    %5 = vector.broadcast %4 : vector<1x1x128xf32> to vector<1x16x128xf32>
    %6 = arith.addf %3, %5 : vector<1x16x128xf32>
    %cst = arith.constant 0.000000e+00 : f32
    %cst_8 = arith.constant 6.000000e+00 : f32
    %7 = vector.broadcast %cst : f32 to vector<1x16x128xf32>
    %8 = arith.maximumf %7, %6 : vector<1x16x128xf32>
    %9 = vector.broadcast %cst_8 : f32 to vector<1x16x128xf32>
    %10 = arith.minimumf %9, %8 : vector<1x16x128xf32>
    %c0_9 = arith.constant 0 : index
    %c0_10 = arith.constant 0 : index
    %c0_11 = arith.constant 0 : index
    %11 = vector.load %arg4[%c0_9, %c0_10, %c0_11] : memref<1x16x128xf32, #tpu.memory_space<vmem>>, vector<1x16x128xf32>
    tpu.vector_store %arg4[%c0_9, %c0_10, %c0_11], %10 {strides = array<i32>} : memref<1x16x128xf32, #tpu.memory_space<vmem>>, vector<1x16x128xf32>,
    return
  }
  func.func @transform_0(%arg0: i32) -> (i32, i32, i32) {
    %c0_i32 = arith.constant 0 : i32
    %c0_i32_0 = arith.constant 0 : i32
    %c0_i32_1 = arith.constant 0 : i32
    return %arg0, %c0_i32, %c0_i32_0 : i32, i32, i32
  }
  func.func @transform_1(%arg0: i32) -> (i32, i32, i32) {
    %c0_i32 = arith.constant 0 : i32
    %c0_i32_0 = arith.constant 0 : i32
    %c0_i32_1 = arith.constant 0 : i32
    %c0_i32_2 = arith.constant 0 : i32
    return %c0_i32, %c0_i32_0, %c0_i32_1 : i32, i32, i32
  }
  func.func @transform_2(%arg0: i32) -> (i32, i32, i32) {
    %c0_i32 = arith.constant 0 : i32
    %c0_i32_0 = arith.constant 0 : i32
    %c0_i32_1 = arith.constant 0 : i32
    %c0_i32_2 = arith.constant 0 : i32
    return %c0_i32, %c0_i32_0, %c0_i32_1 : i32, i32, i32
  }
  func.func @transform_3(%arg0: i32) -> (i32, i32, i32) {
    %c0_i32 = arith.constant 0 : i32
    %c0_i32_0 = arith.constant 0 : i32
    %c0_i32_1 = arith.constant 0 : i32
    return %arg0, %c0_i32, %c0_i32_0 : i32, i32, i32
  }
}

</mosaic_0001>

<llo_original>
// kernel: tile.91
$region0: #{tile.91}
  %s0 = inlined_call_operand.vmem [shape: f32[16,4], index: 0, kind: input, shape index: {}]
  %s1 = inlined_call_operand.vmem [shape: f32[64], index: 1, kind: output, shape index: {}]
  $region1: #{tile.91} parent=0
    #allocation0 [shape = 'u8[4096]{0}', space=vmem, size = 0x1000, scoped, tag = 'scoped mem for output reshape']
    %v2 = vld [vmem:[%s0] sm:$0x1]
    %vm3 = vcmask 31744
    %4 = vst.msk [vmem:[#allocation0] sm:$0x1] %vm3, %v2
    %s5 = scalar_lea.vmem %s0, 15
    %v6 = vld [vmem:[%s5] sm:$0x1]
    %7 = vrot.lane.b32.xlu0 %v6, 60
    %v8 = vpop.permute.xlu0 %7
    %vm9 = vcmask 523744
    %10 = vst.msk [vmem:[#allocation0] sm:$0x1] %vm9, %v8
    %s11 = scalar_lea.vmem %s0, 14
    %v12 = vld [vmem:[%s11] sm:$0x1]
    %13 = vrot.lane.b32.xlu0 %v12, 56
    %v14 = vpop.permute.xlu0 %13
    %vm15 = vcmask 490944
    %16 = vst.msk [vmem:[#allocation0] sm:$0x1] %vm15, %v14
    %s17 = scalar_lea.vmem %s0, 13
    %v18 = vld [vmem:[%s17] sm:$0x1]
    %19 = vrot.lane.b32.xlu0 %v18, 52
    %v20 = vpop.permute.xlu0 %19
    %vm21 = vcmask 458144
    %22 = vst.msk [vmem:[#allocation0] sm:$0x1] %vm21, %v20
    %s23 = scalar_lea.vmem %s0, 12
    %v24 = vld [vmem:[%s23] sm:$0x1]
    %25 = vrot.lane.b32.xlu0 %v24, 48
    %v26 = vpop.permute.xlu0 %25
    %vm27 = vcmask 425344
    %28 = vst.msk [vmem:[#allocation0] sm:$0x1] %vm27, %v26
    %s29 = scalar_lea.vmem %s0, 11
    %v30 = vld [vmem:[%s29] sm:$0x1]
    %31 = vrot.lane.b32.xlu0 %v30, 44
    %v32 = vpop.permute.xlu0 %31
    %vm33 = vcmask 392544
    %34 = vst.msk [vmem:[#allocation0] sm:$0x1] %vm33, %v32
    %s35 = scalar_lea.vmem %s0, 10
    %v36 = vld [vmem:[%s35] sm:$0x1]
    %37 = vrot.lane.b32.xlu0 %v36, 40
    %v38 = vpop.permute.xlu0 %37
    %vm39 = vcmask 359744
    %40 = vst.msk [vmem:[#allocation0] sm:$0x1] %vm39, %v38
    %s41 = scalar_lea.vmem %s0, 9
    %v42 = vld [vmem:[%s41] sm:$0x1]
    %43 = vrot.lane.b32.xlu0 %v42, 36
    %v44 = vpop.permute.xlu0 %43
    %vm45 = vcmask 326944
    %46 = vst.msk [vmem:[#allocation0] sm:$0x1] %vm45, %v44
    %s47 = scalar_lea.vmem %s0, 8
    %v48 = vld [vmem:[%s47] sm:$0x1]
    %49 = vrot.lane.b32.xlu0 %v48, 32
    %v50 = vpop.permute.xlu0 %49
    %vm51 = vcmask 294144
    %52 = vst.msk [vmem:[#allocation0] sm:$0x1] %vm51, %v50
    %s53 = scalar_lea.vmem %s0, 7
    %v54 = vld [vmem:[%s53] sm:$0x1]
    %55 = vrot.lane.b32.xlu0 %v54, 28
    %v56 = vpop.permute.xlu0 %55
    %vm57 = vcmask 261344
    %58 = vst.msk [vmem:[#allocation0] sm:$0x1] %vm57, %v56
    %s59 = scalar_lea.vmem %s0, 6
    %v60 = vld [vmem:[%s59] sm:$0x1]
    %61 = vrot.lane.b32.xlu0 %v60, 24
    %v62 = vpop.permute.xlu0 %61
    %vm63 = vcmask 228544
    %64 = vst.msk [vmem:[#allocation0] sm:$0x1] %vm63, %v62
    %s65 = scalar_lea.vmem %s0, 5
    %v66 = vld [vmem:[%s65] sm:$0x1]
    %67 = vrot.lane.b32.xlu0 %v66, 20
    %v68 = vpop.permute.xlu0 %67
    %vm69 = vcmask 195744
    %70 = vst.msk [vmem:[#allocation0] sm:$0x1] %vm69, %v68
    %s71 = scalar_lea.vmem %s0, 4
    %v72 = vld [vmem:[%s71] sm:$0x1]
    %73 = vrot.lane.b32.xlu0 %v72, 16
    %v74 = vpop.permute.xlu0 %73
    %vm75 = vcmask 162944
    %76 = vst.msk [vmem:[#allocation0] sm:$0x1] %vm75, %v74
    %s77 = scalar_lea.vmem %s0, 3
    %v78 = vld [vmem:[%s77] sm:$0x1]
    %79 = vrot.lane.b32.xlu0 %v78, 12
    %v80 = vpop.permute.xlu0 %79
    %vm81 = vcmask 130144
    %82 = vst.msk [vmem:[#allocation0] sm:$0x1] %vm81, %v80
    %s83 = scalar_lea.vmem %s0, 2
    %v84 = vld [vmem:[%s83] sm:$0x1]
    %85 = vrot.lane.b32.xlu0 %v84, 8
    %v86 = vpop.permute.xlu0 %85
    %vm87 = vcmask 97344
    %88 = vst.msk [vmem:[#allocation0] sm:$0x1] %vm87, %v86
    %s89 = scalar_lea.vmem %s0, 1
    %v90 = vld [vmem:[%s89] sm:$0x1]
    %91 = vrot.lane.b32.xlu0 %v90, 4
    %v92 = vpop.permute.xlu0 %91
    %vm93 = vcmask 64544
    %94 = vst.msk [vmem:[#allocation0] sm:$0x1] %vm93, %v92
    %s96 = ssub.s32 2, 1
    %v97 = vld [vmem:[#allocation0] sm:%s96]
    %s99 = ssub.s32 2, 1
    %100 = vst [vmem:[%s1] sm:%s99] %v97

// kernel: tile.90
$region0: #{tile.90}
  #allocation0 [shape = 's32[1]{0}', space=sflag, size = 0x4, scoped, tag = 'scoped memory for tile.90']
  %s0 = inlined_call_operand.vmem [shape: f32[4], index: 0, kind: input, shape index: {}]
  %s1 = inlined_call_operand.vmem [shape: f32[16,4], index: 1, kind: output, shape index: {}]
  // Predicated region
  $region2: #{tile.90} parent=0 // pred_check
    _
  $region3: #{tile.90} parent=0 // pred_check_branch
    %3 = sbr.rel (0) target = $region5
  $region4: #{tile.90} parent=0 // pred_region
    _
  $region5: #{tile.90} parent=0 // pred_fallthru
    _
  %v4 = vld [vmem:[%s0] ss:$0 sm:$0xff]
  %5 = vst [vmem:[%s1] sm:$0xff] %v4
  %s6 = scalar_lea.vmem %s1, 8
  %7 = vst [vmem:[%s6] sm:$0xff] %v4

// kernel: tile.110
$region0: #{tile.110}
  #allocation0 [shape = 's32[1]{0}', space=sflag, size = 0x4, scoped, tag = 'scoped memory for tile.110']
  %s0 = inlined_call_operand.vmem [shape: f32[8], index: 0, kind: input, shape index: {}]
  %s1 = inlined_call_operand.vmem [shape: f32[16,8], index: 1, kind: output, shape index: {}]
  // Predicated region
  $region2: #{tile.110} parent=0 // pred_check
    _
  $region3: #{tile.110} parent=0 // pred_check_branch
    %3 = sbr.rel (0) target = $region5
  $region4: #{tile.110} parent=0 // pred_region
    _
  $region5: #{tile.110} parent=0 // pred_fallthru
    _
  %v4 = vld [vmem:[%s0] ss:$0 sm:$0xff]
  %5 = vst [vmem:[%s1] sm:$0xff] %v4
  %s6 = scalar_lea.vmem %s1, 8
  %7 = vst [vmem:[%s6] sm:$0xff] %v4

// kernel: tile.111
$region0: #{tile.111}
  %s0 = inlined_call_operand.vmem [shape: f32[16,8], index: 0, kind: input, shape index: {}]
  %s1 = inlined_call_operand.vmem [shape: f32[1,1,128], index: 1, kind: output, shape index: {}]
  $region1: #{tile.111} parent=0
    #allocation0 [shape = 'u8[4096]{0}', space=vmem, size = 0x1000, scoped, tag = 'scoped mem for output reshape']
    %v2 = vld [vmem:[%s0] sm:$0x1]
    %vm3 = vcmask 64512
    %4 = vst.msk [vmem:[#allocation0] sm:$0x1] %vm3, %v2
    %s5 = scalar_lea.vmem %s0, 15
    %v6 = vld [vmem:[%s5] sm:$0x1]
    %7 = vrot.lane.b32.xlu0 %v6, 120
    %v8 = vpop.permute.xlu0 %7
    %vm9 = vcmask 1048512
    %10 = vst.msk [vmem:[#allocation0] sm:$0x1] %vm9, %v8
    %s11 = scalar_lea.vmem %s0, 14
    %v12 = vld [vmem:[%s11] sm:$0x1]
    %13 = vrot.lane.b32.xlu0 %v12, 112
    %v14 = vpop.permute.xlu0 %13
    %vm15 = vcmask 982912
    %16 = vst.msk [vmem:[#allocation0] sm:$0x1] %vm15, %v14
    %s17 = scalar_lea.vmem %s0, 13
    %v18 = vld [vmem:[%s17] sm:$0x1]
    %19 = vrot.lane.b32.xlu0 %v18, 104
    %v20 = vpop.permute.xlu0 %19
    %vm21 = vcmask 917312
    %22 = vst.msk [vmem:[#allocation0] sm:$0x1] %vm21, %v20
    %s23 = scalar_lea.vmem %s0, 12
    %v24 = vld [vmem:[%s23] sm:$0x1]
    %25 = vrot.lane.b32.xlu0 %v24, 96
    %v26 = vpop.permute.xlu0 %25
    %vm27 = vcmask 851712
    %28 = vst.msk [vmem:[#allocation0] sm:$0x1] %vm27, %v26
    %s29 = scalar_lea.vmem %s0, 11
    %v30 = vld [vmem:[%s29] sm:$0x1]
    %31 = vrot.lane.b32.xlu0 %v30, 88
    %v32 = vpop.permute.xlu0 %31
    %vm33 = vcmask 786112
    %34 = vst.msk [vmem:[#allocation0] sm:$0x1] %vm33, %v32
    %s35 = scalar_lea.vmem %s0, 10
    %v36 = vld [vmem:[%s35] sm:$0x1]
    %37 = vrot.lane.b32.xlu0 %v36, 80
    %v38 = vpop.permute.xlu0 %37
    %vm39 = vcmask 720512
    %40 = vst.msk [vmem:[#allocation0] sm:$0x1] %vm39, %v38
    %s41 = scalar_lea.vmem %s0, 9
    %v42 = vld [vmem:[%s41] sm:$0x1]
    %43 = vrot.lane.b32.xlu0 %v42, 72
    %v44 = vpop.permute.xlu0 %43
    %vm45 = vcmask 654912
    %46 = vst.msk [vmem:[#allocation0] sm:$0x1] %vm45, %v44
    %s47 = scalar_lea.vmem %s0, 8
    %v48 = vld [vmem:[%s47] sm:$0x1]
    %49 = vrot.lane.b32.xlu0 %v48, 64
    %v50 = vpop.permute.xlu0 %49
    %vm51 = vcmask 589312
    %52 = vst.msk [vmem:[#allocation0] sm:$0x1] %vm51, %v50
    %s53 = scalar_lea.vmem %s0, 7
    %v54 = vld [vmem:[%s53] sm:$0x1]
    %55 = vrot.lane.b32.xlu0 %v54, 56
    %v56 = vpop.permute.xlu0 %55
    %vm57 = vcmask 523712
    %58 = vst.msk [vmem:[#allocation0] sm:$0x1] %vm57, %v56
    %s59 = scalar_lea.vmem %s0, 6
    %v60 = vld [vmem:[%s59] sm:$0x1]
    %61 = vrot.lane.b32.xlu0 %v60, 48
    %v62 = vpop.permute.xlu0 %61
    %vm63 = vcmask 458112
    %64 = vst.msk [vmem:[#allocation0] sm:$0x1] %vm63, %v62
    %s65 = scalar_lea.vmem %s0, 5
    %v66 = vld [vmem:[%s65] sm:$0x1]
    %67 = vrot.lane.b32.xlu0 %v66, 40
    %v68 = vpop.permute.xlu0 %67
    %vm69 = vcmask 392512
    %70 = vst.msk [vmem:[#allocation0] sm:$0x1] %vm69, %v68
    %s71 = scalar_lea.vmem %s0, 4
    %v72 = vld [vmem:[%s71] sm:$0x1]
    %73 = vrot.lane.b32.xlu0 %v72, 32
    %v74 = vpop.permute.xlu0 %73
    %vm75 = vcmask 326912
    %76 = vst.msk [vmem:[#allocation0] sm:$0x1] %vm75, %v74
    %s77 = scalar_lea.vmem %s0, 3
    %v78 = vld [vmem:[%s77] sm:$0x1]
    %79 = vrot.lane.b32.xlu0 %v78, 24
    %v80 = vpop.permute.xlu0 %79
    %vm81 = vcmask 261312
    %82 = vst.msk [vmem:[#allocation0] sm:$0x1] %vm81, %v80
    %s83 = scalar_lea.vmem %s0, 2
    %v84 = vld [vmem:[%s83] sm:$0x1]
    %85 = vrot.lane.b32.xlu0 %v84, 16
    %v86 = vpop.permute.xlu0 %85
    %vm87 = vcmask 195712
    %88 = vst.msk [vmem:[#allocation0] sm:$0x1] %vm87, %v86
    %s89 = scalar_lea.vmem %s0, 1
    %v90 = vld [vmem:[%s89] sm:$0x1]
    %91 = vrot.lane.b32.xlu0 %v90, 8
    %v92 = vpop.permute.xlu0 %91
    %vm93 = vcmask 130112
    %94 = vst.msk [vmem:[#allocation0] sm:$0x1] %vm93, %v92
    %s96 = ssub.s32 2, 1
    %v97 = vld [vmem:[#allocation0] sm:%s96]
    %s99 = ssub.s32 2, 1
    %100 = vst [vmem:[%s1] sm:%s99] %v97

// kernel: depthwise_sep_conv_block_nhwc.3
$region0: #{depthwise_sep_conv_block_nhwc.3}
  #allocation0 [shape = 'u32[]', space=smem, size = 0x4, offset = 0x4, fixed_abs, tag = 'smem constant byte address 0x4 - core index']
  #allocation1 [shape = 'u32[72,128]{1,0:T(1,128)}', space=vmem, size = 0x9000, scoped, tag = 'internal scratch']
  %s0 = inlined_call_operand.vmem [shape: f32[2,16,128], index: 0, kind: input, shape index: {}]
  %s1 = inlined_call_operand.vmem [shape: f32[9,128], index: 1, kind: input, shape index: {}]
  %s2 = inlined_call_operand.vmem [shape: f32[2,2,128], index: 2, kind: output, shape index: {}]
  %s3 = sld [smem:[#allocation0]]
  $region41: #{depthwise_sep_conv_block_nhwc.3} parent=0
    _
  %s5 = ssub.s32 1, %s3
  %s6 = scalar_select 0, %s5, %s3
  loop: start=0, step=1, limit=4
  $region2: #{depthwise_sep_conv_block_nhwc.3} parent=0 // loop_pre_header
    _
  $region3: #{depthwise_sep_conv_block_nhwc.3} parent=0 // loop_header
    %s8 = sphi 0, %s12
    %p9 = scmp.ge.s32.totalorder %s8, 4
    %s18 = sphi 0, %s20
    %s21 = sphi 0, %s18
    %s22 = sphi 0, %s21
    %s38 = sphi 0, %s22
    %s42 = sphi 0, %s42
    %s44 = sphi 0, %s42
    %s45 = sphi 0, %s44
    %s59 = sphi 0, %s45
    %s65 = sphi 0, %s67
    %s68 = sphi 0, %s65
    %s69 = sphi 0, %s68
    %s85 = sphi 0, %s69
  $region4: #{depthwise_sep_conv_block_nhwc.3} parent=0 // loop_header_branch
    %11 = sbr.rel (%p9) target = $region8
  $region5: #{depthwise_sep_conv_block_nhwc.3} parent=0 // loop_body
    %s13 = ssub.s32 %s8, 1
    %s14 = ssub.s32 %s8, 2
    %s15 = sadd.s32 %s8, 1
    %s16 = ssub.s32 %s8, %s15
    %p17 = scmp.eq.s32.totalorder %s16, 0
    %s19 = sadd.s32 %s18, 1
    %s20 = scalar_select %p17, %s18, %s19
    %p23 = pneg %p17
    %p24 = scmp.eq.s32.totalorder %s8, 1
    %p25 = por %p23, %p24
    %p26 = scmp.ne.s32.totalorder %s18, %s21
    %p27 = scmp.eq.s32.totalorder %s8, 0
    %p28 = por %p26, %p27
    %p29 = scmp.ne.s32.totalorder %s18, %s21
    %p30 = scmp.eq.s32.totalorder %s13, 1
    %p31 = por %p29, %p30
    %p32 = scmp.ne.s32.totalorder %s21, %s22
    %p33 = scmp.eq.s32.totalorder %s13, 0
    %p34 = por %p32, %p33
    %p35 = scmp.ne.s32.totalorder %s21, %s22
    %p36 = scmp.eq.s32.totalorder %s14, 1
    %p37 = por %p35, %p36
    %p39 = scmp.ne.s32.totalorder %s22, %s38
    %p40 = scmp.eq.s32.totalorder %s14, 0
    %p41 = por %p39, %p40
    %s43 = sadd.s32 %s42, 1
    %p46 = scmp.eq.s32.totalorder %s8, 1
    %p47 = scmp.ne.s32.totalorder %s42, %s44
    %p48 = scmp.eq.s32.totalorder %s8, 0
    %p49 = por %p47, %p48
    %p50 = scmp.ne.s32.totalorder %s42, %s44
    %p51 = scmp.eq.s32.totalorder %s13, 1
    %p52 = por %p50, %p51
    %p53 = scmp.ne.s32.totalorder %s44, %s45
    %p54 = scmp.eq.s32.totalorder %s13, 0
    %p55 = por %p53, %p54
    %p56 = scmp.ne.s32.totalorder %s44, %s45
    %p57 = scmp.eq.s32.totalorder %s14, 1
    %p58 = por %p56, %p57
    %p60 = scmp.ne.s32.totalorder %s45, %s59
    %p61 = scmp.eq.s32.totalorder %s14, 0
    %p62 = por %p60, %p61
    %s63 = ssub.s32 %s8, %s15
    %p64 = scmp.eq.s32.totalorder %s63, 0
    %s66 = sadd.s32 %s65, 1
    %s67 = scalar_select %p64, %s65, %s66
    %p70 = pneg %p64
    %p71 = scmp.eq.s32.totalorder %s8, 1
    %p72 = por %p70, %p71
    %p73 = scmp.ne.s32.totalorder %s65, %s68
    %p74 = scmp.eq.s32.totalorder %s8, 0
    %p75 = por %p73, %p74
    %p76 = scmp.ne.s32.totalorder %s65, %s68
    %p77 = scmp.eq.s32.totalorder %s13, 1
    %p78 = por %p76, %p77
    %p79 = scmp.ne.s32.totalorder %s68, %s69
    %p80 = scmp.eq.s32.totalorder %s13, 0
    %p81 = por %p79, %p80
    %p82 = scmp.ne.s32.totalorder %s68, %s69
    %p83 = scmp.eq.s32.totalorder %s14, 1
    %p84 = por %p82, %p83
    %p86 = scmp.ne.s32.totalorder %s69, %s85
    %p87 = scmp.eq.s32.totalorder %s14, 0
    %p88 = por %p86, %p87
    %p89 = scmp.le.s32.totalorder 1, %s8
    %p90 = scmp.lt.s32.totalorder %s8, 3
    %p91 = pnand %p89, %p90
    %p92 = pneg %p91
    // Predicated region
    $region9: #{depthwise_sep_conv_block_nhwc.3} parent=5 // pred_check
      _
    $region10: #{depthwise_sep_conv_block_nhwc.3} parent=5 // pred_check_branch
      %94 = sbr.rel (%p91) target = $region12
    $region11: #{depthwise_sep_conv_block_nhwc.3} parent=5 // pred_region
      %s95 = ssub.s32 %s8, 1
      // Predicated region
      $region13: #{depthwise_sep_conv_block_nhwc.3} parent=11 // pred_check
        %p96 = pneg %p55
      $region14: #{depthwise_sep_conv_block_nhwc.3} parent=11 // pred_check_branch
        %98 = sbr.rel (%p96) target = $region16
      $region15: #{depthwise_sep_conv_block_nhwc.3} parent=11 // pred_region
        _
      $region16: #{depthwise_sep_conv_block_nhwc.3} parent=11 // pred_fallthru
        _
    $region12: #{depthwise_sep_conv_block_nhwc.3} parent=5 // pred_fallthru
      _
    %p99 = scmp.lt.s32.totalorder %s8, 2
    // Predicated region
    $region17: #{depthwise_sep_conv_block_nhwc.3} parent=5 // pred_check
      %p100 = pneg %p99
    $region18: #{depthwise_sep_conv_block_nhwc.3} parent=5 // pred_check_branch
      %102 = sbr.rel (%p100) target = $region20
    $region19: #{depthwise_sep_conv_block_nhwc.3} parent=5 // pred_region
      // Predicated region
      $region21: #{depthwise_sep_conv_block_nhwc.3} parent=19 // pred_check
        %p103 = pneg %p28
      $region22: #{depthwise_sep_conv_block_nhwc.3} parent=19 // pred_check_branch
        %105 = sbr.rel (%p103) target = $region24
      $region23: #{depthwise_sep_conv_block_nhwc.3} parent=19 // pred_region
        %p106 = scmp.lt.s32.totalorder %s8, 1
        %s107 = scalar_select %p106, %s8, 1
        %s108 = smul.addr %s107, 2
        %s109 = smul.addr %s108, 8
        %s110 = scalar_lea.vmem %s0, %s109
      $region24: #{depthwise_sep_conv_block_nhwc.3} parent=19 // pred_fallthru
        _
    $region20: #{depthwise_sep_conv_block_nhwc.3} parent=5 // pred_fallthru
      _
    %p111 = scmp.le.s32.totalorder 1, %s8
    %p112 = scmp.lt.s32.totalorder %s8, 3
    %p113 = pnand %p111, %p112
    %p114 = pneg %p113
    // Predicated region
    $region25: #{depthwise_sep_conv_block_nhwc.3} parent=5 // pred_check
      _
    $region26: #{depthwise_sep_conv_block_nhwc.3} parent=5 // pred_check_branch
      %116 = sbr.rel (%p113) target = $region28
    $region27: #{depthwise_sep_conv_block_nhwc.3} parent=5 // pred_region
      %s117 = ssub.s32 %s8, 1
      %p118 = scmp.lt.s32.totalorder %s13, 1
      %s119 = scalar_select %p118, %s13, 1
      %s120 = smul.addr %s119, 2
      %s121 = smul.addr %s120, 8
      %s122 = scalar_lea.vmem %s0, %s121
      %p123 = pneg %p34
      %p124 = pneg %p31
      %p125 = pneg %p55
      %p126 = pneg %p52
      %p127 = pneg %p81
      %p128 = pneg %p78
      %p129 = scmp.lt.s32.totalorder %s13, 1
      %s130 = scalar_select %p129, %s13, 1
      %s131 = smul.addr %s130, 2
      %s132 = scalar_lea.vmem %s2, %s131
      %p133 = scmp.lt.s32.totalorder %s13, 1
      %s134 = scalar_select %p133, %s13, 1
      %s135 = smul.addr %s134, 2
      %s136 = smul.addr %s135, 8
      %s137 = scalar_lea.vmem %s0, %s136
      %p138 = scmp.lt.s32.totalorder %s13, 1
      %s139 = scalar_select %p138, %s13, 1
      %s140 = smul.addr %s139, 2
      %s141 = scalar_lea.vmem %s2, %s140
      %v142 = vld [vmem:[%s137] sm:$0xff]
      %v143 = vld [vmem:[%s137 + $0x8] sm:$0xff]
      %v144 = vlaneseq
      %v145 = vshrl.u32 %v144, 7
      %v146 = vadd.s32 %v145, 8
      %v147 = vrot.slane %v142, 7
      %v148 = vrot.slane %v143, 7
      %vm149 = vcmp.lt.s32.totalorder %v145, 1
      %v150 = vsel %vm149, %v147, %v148
      %v151 = vsel %vm149, %v148, %v147
      %vm152 = vcmp.ge.s32.totalorder %v145, 1
      %vm153 = vcmp.ge.s32.totalorder %v146, 1
      %v154 = vsel %vm152, 1, 0
      %v155 = vsel %vm153, 1, 0
      %vm156 = vcmp.eq.s32.totalorder %v154, 1
      %vm157 = vcmp.eq.s32.totalorder %v155, 1
      %v158 = vsel %vm156, %v151, 0.0
      %v159 = vsel %vm157, %v150, 0.0
      %160 = vrot.lane.b32.xlu0 %v158, 4
      %v161 = vpop.permute.xlu0 %160
      %162 = vrot.lane.b32.xlu0 %v159, 4
      %v163 = vpop.permute.xlu0 %162
      %v164 = vld [vmem:[%s1] sm:$0x1]
      %v165 = vperm.slane %v164, 0
      %v166 = vmul.f32 %v161, %v165
      %v167 = vmul.f32 %v163, %v165
      %v168 = vadd.f32 %v166, 0.0
      %v169 = vadd.f32 %v167, 0.0
      %v170 = vld [vmem:[%s1 + $0x1] sm:$0x1]
      %v171 = vperm.slane %v170, 0
      %v172 = vmul.f32 %v158, %v171
      %v173 = vmul.f32 %v159, %v171
      %v174 = vadd.f32 %v168, %v172
      %v175 = vadd.f32 %v169, %v173
      %176 = vrot.lane.b32.xlu0 %v158, 124
      %v177 = vpop.permute.xlu0 %176
      %178 = vrot.lane.b32.xlu0 %v159, 124
      %v179 = vpop.permute.xlu0 %178
      %v180 = vld [vmem:[%s1 + $0x2] sm:$0x1]
      %v181 = vperm.slane %v180, 0
      %v182 = vmul.f32 %v177, %v181
      %v183 = vmul.f32 %v179, %v181
      %v184 = vadd.f32 %v174, %v182
      %v185 = vadd.f32 %v175, %v183
      %186 = vrot.lane.b32.xlu0 %v142, 4
      %v187 = vpop.permute.xlu0 %186
      %188 = vrot.lane.b32.xlu0 %v143, 4
      %v189 = vpop.permute.xlu0 %188
      %v190 = vld [vmem:[%s1 + $0x3] sm:$0x1]
      %v191 = vperm.slane %v190, 0
      %v192 = vmul.f32 %v187, %v191
      %v193 = vmul.f32 %v189, %v191
      %v194 = vadd.f32 %v184, %v192
      %v195 = vadd.f32 %v185, %v193
      %v196 = vld [vmem:[%s1 + $0x4] sm:$0x1]
      %v197 = vperm.slane %v196, 0
      %v198 = vmul.f32 %v142, %v197
      %v199 = vmul.f32 %v143, %v197
      %v200 = vadd.f32 %v194, %v198
      %v201 = vadd.f32 %v195, %v199
      %202 = vrot.lane.b32.xlu0 %v142, 124
      %v203 = vpop.permute.xlu0 %202
      %204 = vrot.lane.b32.xlu0 %v143, 124
      %v205 = vpop.permute.xlu0 %204
      %v206 = vld [vmem:[%s1 + $0x5] sm:$0x1]
      %v207 = vperm.slane %v206, 0
      %v208 = vmul.f32 %v203, %v207
      %v209 = vmul.f32 %v205, %v207
      %v210 = vadd.f32 %v200, %v208
      %v211 = vadd.f32 %v201, %v209
      %v212 = vrot.slane %v142, 1
      %v213 = vrot.slane %v143, 1
      %vm214 = vcmp.lt.s32.totalorder %v145, 7
      %v215 = vsel %vm214, %v212, %v213
      %v216 = vsel %vm214, %v213, %v212
      %vm217 = vcmp.le.s32.totalorder %v145, 14
      %vm218 = vcmp.le.s32.totalorder %v146, 14
      %v219 = vsel %vm217, 1, 0
      %v220 = vsel %vm218, 1, 0
      %vm221 = vcmp.eq.s32.totalorder %v219, 1
      %vm222 = vcmp.eq.s32.totalorder %v220, 1
      %v223 = vsel %vm221, %v215, 0.0
      %v224 = vsel %vm222, %v216, 0.0
      %225 = vrot.lane.b32.xlu0 %v223, 4
      %v226 = vpop.permute.xlu0 %225
      %227 = vrot.lane.b32.xlu0 %v224, 4
      %v228 = vpop.permute.xlu0 %227
      %v229 = vld [vmem:[%s1 + $0x6] sm:$0x1]
      %v230 = vperm.slane %v229, 0
      %v231 = vmul.f32 %v226, %v230
      %v232 = vmul.f32 %v228, %v230
      %v233 = vadd.f32 %v210, %v231
      %v234 = vadd.f32 %v211, %v232
      %v235 = vld [vmem:[%s1 + $0x7] sm:$0x1]
      %v236 = vperm.slane %v235, 0
      %v237 = vmul.f32 %v223, %v236
      %v238 = vmul.f32 %v224, %v236
      %v239 = vadd.f32 %v233, %v237
      %v240 = vadd.f32 %v234, %v238
      %241 = vrot.lane.b32.xlu0 %v223, 124
      %v242 = vpop.permute.xlu0 %241
      %243 = vrot.lane.b32.xlu0 %v224, 124
      %v244 = vpop.permute.xlu0 %243
      %v245 = vld [vmem:[%s1 + $0x8] sm:$0x1]
      %v246 = vperm.slane %v245, 0
      %v247 = vmul.f32 %v242, %v246
      %v248 = vmul.f32 %v244, %v246
      %v249 = vadd.f32 %v239, %v247
      %v250 = vadd.f32 %v240, %v248
      %v251 = vadd.f32 %v249, %v250
      %v252 = vrot.slane %v251, 4
      %v253 = vadd.f32 %v251, %v252
      %v254 = vrot.slane %v253, 2
      %v255 = vadd.f32 %v253, %v254
      %v256 = vrot.slane %v255, 1
      %v257 = vadd.f32 %v255, %v256
      %258 = vst [vmem:[%s141] sm:$0x1] %v257
      %v259 = vmul.f32 %v249, %v249
      %v260 = vmul.f32 %v250, %v250
      %v261 = vadd.f32 %v259, %v260
      %v262 = vrot.slane %v261, 4
      %v263 = vadd.f32 %v261, %v262
      %v264 = vrot.slane %v263, 2
      %v265 = vadd.f32 %v263, %v264
      %v266 = vrot.slane %v265, 1
      %v267 = vadd.f32 %v265, %v266
      %268 = vst [vmem:[%s141 + $0x1] sm:$0x1] %v267
      %p269 = scmp.lt.s32.totalorder %s13, 1
      %s270 = scalar_select %p269, %s13, 1
      %s271 = smul.addr %s270, 2
      %s272 = scalar_lea.vmem %s2, %s271
      // Predicated region
      $region29: #{depthwise_sep_conv_block_nhwc.3} parent=27 // pred_check
        %p273 = pneg %p78
      $region30: #{depthwise_sep_conv_block_nhwc.3} parent=27 // pred_check_branch
        %275 = sbr.rel (%p273) target = $region32
      $region31: #{depthwise_sep_conv_block_nhwc.3} parent=27 // pred_region
        _
      $region32: #{depthwise_sep_conv_block_nhwc.3} parent=27 // pred_fallthru
        _
    $region28: #{depthwise_sep_conv_block_nhwc.3} parent=5 // pred_fallthru
      _
    %p276 = scmp.le.s32.totalorder 2, %s8
    // Predicated region
    $region33: #{depthwise_sep_conv_block_nhwc.3} parent=5 // pred_check
      %p277 = pneg %p276
    $region34: #{depthwise_sep_conv_block_nhwc.3} parent=5 // pred_check_branch
      %279 = sbr.rel (%p277) target = $region36
    $region35: #{depthwise_sep_conv_block_nhwc.3} parent=5 // pred_region
      %s280 = ssub.s32 %s8, 2
      // Predicated region
      $region37: #{depthwise_sep_conv_block_nhwc.3} parent=35 // pred_check
        %p281 = pneg %p84
      $region38: #{depthwise_sep_conv_block_nhwc.3} parent=35 // pred_check_branch
        %283 = sbr.rel (%p281) target = $region40
      $region39: #{depthwise_sep_conv_block_nhwc.3} parent=35 // pred_region
        %p284 = scmp.lt.s32.totalorder %s14, 1
        %s285 = scalar_select %p284, %s14, 1
        %s286 = smul.addr %s285, 2
        %s287 = scalar_lea.vmem %s2, %s286
      $region40: #{depthwise_sep_conv_block_nhwc.3} parent=35 // pred_fallthru
        _
    $region36: #{depthwise_sep_conv_block_nhwc.3} parent=5 // pred_fallthru
      _
  $region6: #{depthwise_sep_conv_block_nhwc.3} parent=0 // loop_footer
    %s12 = sadd.s32 1, %s8
  $region7: #{depthwise_sep_conv_block_nhwc.3} parent=0 // loop_footer_branch
    %7 = sbr.rel target = $region3
  $region8: #{depthwise_sep_conv_block_nhwc.3} parent=0 // loop_exit
    _

// kernel: depthwise_sep_conv_block_nhwc.5
$region0: #{depthwise_sep_conv_block_nhwc.5}
  #allocation0 [shape = 'u32[]', space=smem, size = 0x4, offset = 0x4, fixed_abs, tag = 'smem constant byte address 0x4 - core index']
  #allocation1 [shape = 'u32[72,128]{1,0:T(1,128)}', space=vmem, size = 0x9000, scoped, tag = 'internal scratch']
  %s0 = inlined_call_operand.vmem [shape: f32[2,16,128], index: 0, kind: input, shape index: {}]
  %s1 = inlined_call_operand.vmem [shape: f32[1,1,128], index: 1, kind: input, shape index: {}]
  %s2 = inlined_call_operand.vmem [shape: f32[1,1,128], index: 2, kind: input, shape index: {}]
  %s3 = inlined_call_operand.vmem [shape: f32[2,16,128], index: 3, kind: output, shape index: {}]
  %s4 = sld [smem:[#allocation0]]
  $region45: #{depthwise_sep_conv_block_nhwc.5} parent=0
    _
  %s6 = ssub.s32 1, %s4
  %s7 = scalar_select 0, %s6, %s4
  loop: start=0, step=1, limit=4
  $region2: #{depthwise_sep_conv_block_nhwc.5} parent=0 // loop_pre_header
    _
  $region3: #{depthwise_sep_conv_block_nhwc.5} parent=0 // loop_header
    %s9 = sphi 0, %s13
    %p10 = scmp.ge.s32.totalorder %s9, 4
    %s19 = sphi 0, %s21
    %s22 = sphi 0, %s19
    %s23 = sphi 0, %s22
    %s39 = sphi 0, %s23
    %s43 = sphi 0, %s43
    %s45 = sphi 0, %s43
    %s46 = sphi 0, %s45
    %s60 = sphi 0, %s46
    %s64 = sphi 0, %s64
    %s66 = sphi 0, %s64
    %s67 = sphi 0, %s66
    %s81 = sphi 0, %s67
    %s87 = sphi 0, %s89
    %s90 = sphi 0, %s87
    %s91 = sphi 0, %s90
    %s107 = sphi 0, %s91
  $region4: #{depthwise_sep_conv_block_nhwc.5} parent=0 // loop_header_branch
    %12 = sbr.rel (%p10) target = $region8
  $region5: #{depthwise_sep_conv_block_nhwc.5} parent=0 // loop_body
    %s14 = ssub.s32 %s9, 1
    %s15 = ssub.s32 %s9, 2
    %s16 = sadd.s32 %s9, 1
    %s17 = ssub.s32 %s9, %s16
    %p18 = scmp.eq.s32.totalorder %s17, 0
    %s20 = sadd.s32 %s19, 1
    %s21 = scalar_select %p18, %s19, %s20
    %p24 = pneg %p18
    %p25 = scmp.eq.s32.totalorder %s9, 1
    %p26 = por %p24, %p25
    %p27 = scmp.ne.s32.totalorder %s19, %s22
    %p28 = scmp.eq.s32.totalorder %s9, 0
    %p29 = por %p27, %p28
    %p30 = scmp.ne.s32.totalorder %s19, %s22
    %p31 = scmp.eq.s32.totalorder %s14, 1
    %p32 = por %p30, %p31
    %p33 = scmp.ne.s32.totalorder %s22, %s23
    %p34 = scmp.eq.s32.totalorder %s14, 0
    %p35 = por %p33, %p34
    %p36 = scmp.ne.s32.totalorder %s22, %s23
    %p37 = scmp.eq.s32.totalorder %s15, 1
    %p38 = por %p36, %p37
    %p40 = scmp.ne.s32.totalorder %s23, %s39
    %p41 = scmp.eq.s32.totalorder %s15, 0
    %p42 = por %p40, %p41
    %s44 = sadd.s32 %s43, 1
    %p47 = scmp.eq.s32.totalorder %s9, 1
    %p48 = scmp.ne.s32.totalorder %s43, %s45
    %p49 = scmp.eq.s32.totalorder %s9, 0
    %p50 = por %p48, %p49
    %p51 = scmp.ne.s32.totalorder %s43, %s45
    %p52 = scmp.eq.s32.totalorder %s14, 1
    %p53 = por %p51, %p52
    %p54 = scmp.ne.s32.totalorder %s45, %s46
    %p55 = scmp.eq.s32.totalorder %s14, 0
    %p56 = por %p54, %p55
    %p57 = scmp.ne.s32.totalorder %s45, %s46
    %p58 = scmp.eq.s32.totalorder %s15, 1
    %p59 = por %p57, %p58
    %p61 = scmp.ne.s32.totalorder %s46, %s60
    %p62 = scmp.eq.s32.totalorder %s15, 0
    %p63 = por %p61, %p62
    %s65 = sadd.s32 %s64, 1
    %p68 = scmp.eq.s32.totalorder %s9, 1
    %p69 = scmp.ne.s32.totalorder %s64, %s66
    %p70 = scmp.eq.s32.totalorder %s9, 0
    %p71 = por %p69, %p70
    %p72 = scmp.ne.s32.totalorder %s64, %s66
    %p73 = scmp.eq.s32.totalorder %s14, 1
    %p74 = por %p72, %p73
    %p75 = scmp.ne.s32.totalorder %s66, %s67
    %p76 = scmp.eq.s32.totalorder %s14, 0
    %p77 = por %p75, %p76
    %p78 = scmp.ne.s32.totalorder %s66, %s67
    %p79 = scmp.eq.s32.totalorder %s15, 1
    %p80 = por %p78, %p79
    %p82 = scmp.ne.s32.totalorder %s67, %s81
    %p83 = scmp.eq.s32.totalorder %s15, 0
    %p84 = por %p82, %p83
    %s85 = ssub.s32 %s9, %s16
    %p86 = scmp.eq.s32.totalorder %s85, 0
    %s88 = sadd.s32 %s87, 1
    %s89 = scalar_select %p86, %s87, %s88
    %p92 = pneg %p86
    %p93 = scmp.eq.s32.totalorder %s9, 1
    %p94 = por %p92, %p93
    %p95 = scmp.ne.s32.totalorder %s87, %s90
    %p96 = scmp.eq.s32.totalorder %s9, 0
    %p97 = por %p95, %p96
    %p98 = scmp.ne.s32.totalorder %s87, %s90
    %p99 = scmp.eq.s32.totalorder %s14, 1
    %p100 = por %p98, %p99
    %p101 = scmp.ne.s32.totalorder %s90, %s91
    %p102 = scmp.eq.s32.totalorder %s14, 0
    %p103 = por %p101, %p102
    %p104 = scmp.ne.s32.totalorder %s90, %s91
    %p105 = scmp.eq.s32.totalorder %s15, 1
    %p106 = por %p104, %p105
    %p108 = scmp.ne.s32.totalorder %s91, %s107
    %p109 = scmp.eq.s32.totalorder %s15, 0
    %p110 = por %p108, %p109
    %p111 = scmp.le.s32.totalorder 1, %s9
    %p112 = scmp.lt.s32.totalorder %s9, 3
    %p113 = pnand %p111, %p112
    %p114 = pneg %p113
    // Predicated region
    $region9: #{depthwise_sep_conv_block_nhwc.5} parent=5 // pred_check
      _
    $region10: #{depthwise_sep_conv_block_nhwc.5} parent=5 // pred_check_branch
      %116 = sbr.rel (%p113) target = $region12
    $region11: #{depthwise_sep_conv_block_nhwc.5} parent=5 // pred_region
      %s117 = ssub.s32 %s9, 1
      // Predicated region
      $region13: #{depthwise_sep_conv_block_nhwc.5} parent=11 // pred_check
        %p118 = pneg %p56
      $region14: #{depthwise_sep_conv_block_nhwc.5} parent=11 // pred_check_branch
        %120 = sbr.rel (%p118) target = $region16
      $region15: #{depthwise_sep_conv_block_nhwc.5} parent=11 // pred_region
        _
      $region16: #{depthwise_sep_conv_block_nhwc.5} parent=11 // pred_fallthru
        _
      // Predicated region
      $region17: #{depthwise_sep_conv_block_nhwc.5} parent=11 // pred_check
        %p121 = pneg %p77
      $region18: #{depthwise_sep_conv_block_nhwc.5} parent=11 // pred_check_branch
        %123 = sbr.rel (%p121) target = $region20
      $region19: #{depthwise_sep_conv_block_nhwc.5} parent=11 // pred_region
        _
      $region20: #{depthwise_sep_conv_block_nhwc.5} parent=11 // pred_fallthru
        _
    $region12: #{depthwise_sep_conv_block_nhwc.5} parent=5 // pred_fallthru
      _
    %p124 = scmp.lt.s32.totalorder %s9, 2
    // Predicated region
    $region21: #{depthwise_sep_conv_block_nhwc.5} parent=5 // pred_check
      %p125 = pneg %p124
    $region22: #{depthwise_sep_conv_block_nhwc.5} parent=5 // pred_check_branch
      %127 = sbr.rel (%p125) target = $region24
    $region23: #{depthwise_sep_conv_block_nhwc.5} parent=5 // pred_region
      // Predicated region
      $region25: #{depthwise_sep_conv_block_nhwc.5} parent=23 // pred_check
        %p128 = pneg %p29
      $region26: #{depthwise_sep_conv_block_nhwc.5} parent=23 // pred_check_branch
        %130 = sbr.rel (%p128) target = $region28
      $region27: #{depthwise_sep_conv_block_nhwc.5} parent=23 // pred_region
        %p131 = scmp.lt.s32.totalorder %s9, 1
        %s132 = scalar_select %p131, %s9, 1
        %s133 = smul.addr %s132, 2
        %s134 = smul.addr %s133, 8
        %s135 = scalar_lea.vmem %s0, %s134
      $region28: #{depthwise_sep_conv_block_nhwc.5} parent=23 // pred_fallthru
        _
    $region24: #{depthwise_sep_conv_block_nhwc.5} parent=5 // pred_fallthru
      _
    %p136 = scmp.le.s32.totalorder 1, %s9
    %p137 = scmp.lt.s32.totalorder %s9, 3
    %p138 = pnand %p136, %p137
    %p139 = pneg %p138
    // Predicated region
    $region29: #{depthwise_sep_conv_block_nhwc.5} parent=5 // pred_check
      _
    $region30: #{depthwise_sep_conv_block_nhwc.5} parent=5 // pred_check_branch
      %141 = sbr.rel (%p138) target = $region32
    $region31: #{depthwise_sep_conv_block_nhwc.5} parent=5 // pred_region
      %s142 = ssub.s32 %s9, 1
      %p143 = scmp.lt.s32.totalorder %s14, 1
      %s144 = scalar_select %p143, %s14, 1
      %s145 = smul.addr %s144, 2
      %s146 = smul.addr %s145, 8
      %s147 = scalar_lea.vmem %s0, %s146
      %p148 = pneg %p35
      %p149 = pneg %p32
      %p150 = pneg %p56
      %p151 = pneg %p53
      %p152 = pneg %p77
      %p153 = pneg %p74
      %p154 = pneg %p103
      %p155 = pneg %p100
      %p156 = scmp.lt.s32.totalorder %s14, 1
      %s157 = scalar_select %p156, %s14, 1
      %s158 = smul.addr %s157, 2
      %s159 = smul.addr %s158, 8
      %s160 = scalar_lea.vmem %s3, %s159
      %p161 = scmp.lt.s32.totalorder %s14, 1
      %s162 = scalar_select %p161, %s14, 1
      %s163 = smul.addr %s162, 2
      %s164 = smul.addr %s163, 8
      %s165 = scalar_lea.vmem %s0, %s164
      %p166 = scmp.lt.s32.totalorder %s14, 1
      %s167 = scalar_select %p166, %s14, 1
      %s168 = smul.addr %s167, 2
      %s169 = smul.addr %s168, 8
      %s170 = scalar_lea.vmem %s3, %s169
      %v171 = vld [vmem:[%s165] sm:$0xff]
      %v172 = vld [vmem:[%s165 + $0x8] sm:$0xff]
      %v173 = vld [vmem:[%s1] sm:$0x1]
      %v175 = vperm.slane %v173, 0
      %v177 = vmul.f32 %v171, %v175
      %v178 = vmul.f32 %v172, %v175
      %v179 = vld [vmem:[%s2] sm:$0x1]
      %v181 = vperm.slane %v179, 0
      %v183 = vadd.f32 %v177, %v181
      %v184 = vadd.f32 %v178, %v181
      %v185 = vmax.f32 %v183, 0.0
      %v186 = vmax.f32 %v184, 0.0
      %v187 = vmin.f32 %v185, 6.0
      %v188 = vmin.f32 %v186, 6.0
      %189 = vst [vmem:[%s170] sm:$0xff] %v187
      %190 = vst [vmem:[%s170 + $0x8] sm:$0xff] %v188
      %p191 = scmp.lt.s32.totalorder %s14, 1
      %s192 = scalar_select %p191, %s14, 1
      %s193 = smul.addr %s192, 2
      %s194 = smul.addr %s193, 8
      %s195 = scalar_lea.vmem %s3, %s194
      // Predicated region
      $region33: #{depthwise_sep_conv_block_nhwc.5} parent=31 // pred_check
        %p196 = pneg %p100
      $region34: #{depthwise_sep_conv_block_nhwc.5} parent=31 // pred_check_branch
        %198 = sbr.rel (%p196) target = $region36
      $region35: #{depthwise_sep_conv_block_nhwc.5} parent=31 // pred_region
        _
      $region36: #{depthwise_sep_conv_block_nhwc.5} parent=31 // pred_fallthru
        _
    $region32: #{depthwise_sep_conv_block_nhwc.5} parent=5 // pred_fallthru
      _
    %p199 = scmp.le.s32.totalorder 2, %s9
    // Predicated region
    $region37: #{depthwise_sep_conv_block_nhwc.5} parent=5 // pred_check
      %p200 = pneg %p199
    $region38: #{depthwise_sep_conv_block_nhwc.5} parent=5 // pred_check_branch
      %202 = sbr.rel (%p200) target = $region40
    $region39: #{depthwise_sep_conv_block_nhwc.5} parent=5 // pred_region
      %s203 = ssub.s32 %s9, 2
      // Predicated region
      $region41: #{depthwise_sep_conv_block_nhwc.5} parent=39 // pred_check
        %p204 = pneg %p106
      $region42: #{depthwise_sep_conv_block_nhwc.5} parent=39 // pred_check_branch
        %206 = sbr.rel (%p204) target = $region44
      $region43: #{depthwise_sep_conv_block_nhwc.5} parent=39 // pred_region
        %p207 = scmp.lt.s32.totalorder %s15, 1
        %s208 = scalar_select %p207, %s15, 1
        %s209 = smul.addr %s208, 2
        %s210 = smul.addr %s209, 8
        %s211 = scalar_lea.vmem %s3, %s210
      $region44: #{depthwise_sep_conv_block_nhwc.5} parent=39 // pred_fallthru
        _
    $region40: #{depthwise_sep_conv_block_nhwc.5} parent=5 // pred_fallthru
      _
  $region6: #{depthwise_sep_conv_block_nhwc.5} parent=0 // loop_footer
    %s13 = sadd.s32 1, %s9
  $region7: #{depthwise_sep_conv_block_nhwc.5} parent=0 // loop_footer_branch
    %8 = sbr.rel target = $region3
  $region8: #{depthwise_sep_conv_block_nhwc.5} parent=0 // loop_exit
    _

// kernel: depthwise_sep_conv_block_nhwc.4
$region0: #{depthwise_sep_conv_block_nhwc.4}
  #allocation0 [shape = 'u32[]', space=smem, size = 0x4, offset = 0x4, fixed_abs, tag = 'smem constant byte address 0x4 - core index']
  #allocation1 [shape = 'u32[72,128]{1,0:T(1,128)}', space=vmem, size = 0x9000, scoped, tag = 'internal scratch']
  %s0 = inlined_call_operand.vmem [shape: f32[2,16,128], index: 0, kind: input, shape index: {}]
  %s1 = inlined_call_operand.vmem [shape: f32[9,128], index: 1, kind: input, shape index: {}]
  %s2 = inlined_call_operand.vmem [shape: f32[1,128], index: 2, kind: input, shape index: {}]
  %s3 = inlined_call_operand.vmem [shape: f32[1,128], index: 3, kind: input, shape index: {}]
  %s4 = inlined_call_operand.vmem [shape: bf16[128,128], index: 4, kind: input, shape index: {}]
  %s5 = inlined_call_operand.vmem [shape: f32[2,16,128], index: 5, kind: output, shape index: {0}]
  %s6 = inlined_call_operand.vmem [shape: f32[2,2,128], index: 6, kind: output, shape index: {1}]
  %7 = xla_tuple %s5, %s6
  %s8 = sld [smem:[#allocation0]]
  $region61: #{depthwise_sep_conv_block_nhwc.4} parent=0
    _
  %s10 = ssub.s32 1, %s8
  %s11 = scalar_select 0, %s10, %s8
  loop: start=0, step=1, limit=4
  $region2: #{depthwise_sep_conv_block_nhwc.4} parent=0 // loop_pre_header
    _
  $region3: #{depthwise_sep_conv_block_nhwc.4} parent=0 // loop_header
    %s13 = sphi 0, %s17
    %p14 = scmp.ge.s32.totalorder %s13, 4
    %s23 = sphi 0, %s25
    %s26 = sphi 0, %s23
    %s27 = sphi 0, %s26
    %s43 = sphi 0, %s27
    %s47 = sphi 0, %s47
    %s49 = sphi 0, %s47
    %s50 = sphi 0, %s49
    %s64 = sphi 0, %s50
    %s68 = sphi 0, %s68
    %s70 = sphi 0, %s68
    %s71 = sphi 0, %s70
    %s85 = sphi 0, %s71
    %s89 = sphi 0, %s89
    %s91 = sphi 0, %s89
    %s92 = sphi 0, %s91
    %s106 = sphi 0, %s92
    %s110 = sphi 0, %s110
    %s112 = sphi 0, %s110
    %s113 = sphi 0, %s112
    %s127 = sphi 0, %s113
    %s133 = sphi 0, %s135
    %s136 = sphi 0, %s133
    %s137 = sphi 0, %s136
    %s153 = sphi 0, %s137
    %s159 = sphi 0, %s161
    %s162 = sphi 0, %s159
    %s163 = sphi 0, %s162
    %s179 = sphi 0, %s163
  $region4: #{depthwise_sep_conv_block_nhwc.4} parent=0 // loop_header_branch
    %16 = sbr.rel (%p14) target = $region8
  $region5: #{depthwise_sep_conv_block_nhwc.4} parent=0 // loop_body
    %s18 = ssub.s32 %s13, 1
    %s19 = ssub.s32 %s13, 2
    %s20 = sadd.s32 %s13, 1
    %s21 = ssub.s32 %s13, %s20
    %p22 = scmp.eq.s32.totalorder %s21, 0
    %s24 = sadd.s32 %s23, 1
    %s25 = scalar_select %p22, %s23, %s24
    %p28 = pneg %p22
    %p29 = scmp.eq.s32.totalorder %s13, 1
    %p30 = por %p28, %p29
    %p31 = scmp.ne.s32.totalorder %s23, %s26
    %p32 = scmp.eq.s32.totalorder %s13, 0
    %p33 = por %p31, %p32
    %p34 = scmp.ne.s32.totalorder %s23, %s26
    %p35 = scmp.eq.s32.totalorder %s18, 1
    %p36 = por %p34, %p35
    %p37 = scmp.ne.s32.totalorder %s26, %s27
    %p38 = scmp.eq.s32.totalorder %s18, 0
    %p39 = por %p37, %p38
    %p40 = scmp.ne.s32.totalorder %s26, %s27
    %p41 = scmp.eq.s32.totalorder %s19, 1
    %p42 = por %p40, %p41
    %p44 = scmp.ne.s32.totalorder %s27, %s43
    %p45 = scmp.eq.s32.totalorder %s19, 0
    %p46 = por %p44, %p45
    %s48 = sadd.s32 %s47, 1
    %p51 = scmp.eq.s32.totalorder %s13, 1
    %p52 = scmp.ne.s32.totalorder %s47, %s49
    %p53 = scmp.eq.s32.totalorder %s13, 0
    %p54 = por %p52, %p53
    %p55 = scmp.ne.s32.totalorder %s47, %s49
    %p56 = scmp.eq.s32.totalorder %s18, 1
    %p57 = por %p55, %p56
    %p58 = scmp.ne.s32.totalorder %s49, %s50
    %p59 = scmp.eq.s32.totalorder %s18, 0
    %p60 = por %p58, %p59
    %p61 = scmp.ne.s32.totalorder %s49, %s50
    %p62 = scmp.eq.s32.totalorder %s19, 1
    %p63 = por %p61, %p62
    %p65 = scmp.ne.s32.totalorder %s50, %s64
    %p66 = scmp.eq.s32.totalorder %s19, 0
    %p67 = por %p65, %p66
    %s69 = sadd.s32 %s68, 1
    %p72 = scmp.eq.s32.totalorder %s13, 1
    %p73 = scmp.ne.s32.totalorder %s68, %s70
    %p74 = scmp.eq.s32.totalorder %s13, 0
    %p75 = por %p73, %p74
    %p76 = scmp.ne.s32.totalorder %s68, %s70
    %p77 = scmp.eq.s32.totalorder %s18, 1
    %p78 = por %p76, %p77
    %p79 = scmp.ne.s32.totalorder %s70, %s71
    %p80 = scmp.eq.s32.totalorder %s18, 0
    %p81 = por %p79, %p80
    %p82 = scmp.ne.s32.totalorder %s70, %s71
    %p83 = scmp.eq.s32.totalorder %s19, 1
    %p84 = por %p82, %p83
    %p86 = scmp.ne.s32.totalorder %s71, %s85
    %p87 = scmp.eq.s32.totalorder %s19, 0
    %p88 = por %p86, %p87
    %s90 = sadd.s32 %s89, 1
    %p93 = scmp.eq.s32.totalorder %s13, 1
    %p94 = scmp.ne.s32.totalorder %s89, %s91
    %p95 = scmp.eq.s32.totalorder %s13, 0
    %p96 = por %p94, %p95
    %p97 = scmp.ne.s32.totalorder %s89, %s91
    %p98 = scmp.eq.s32.totalorder %s18, 1
    %p99 = por %p97, %p98
    %p100 = scmp.ne.s32.totalorder %s91, %s92
    %p101 = scmp.eq.s32.totalorder %s18, 0
    %p102 = por %p100, %p101
    %p103 = scmp.ne.s32.totalorder %s91, %s92
    %p104 = scmp.eq.s32.totalorder %s19, 1
    %p105 = por %p103, %p104
    %p107 = scmp.ne.s32.totalorder %s92, %s106
    %p108 = scmp.eq.s32.totalorder %s19, 0
    %p109 = por %p107, %p108
    %s111 = sadd.s32 %s110, 1
    %p114 = scmp.eq.s32.totalorder %s13, 1
    %p115 = scmp.ne.s32.totalorder %s110, %s112
    %p116 = scmp.eq.s32.totalorder %s13, 0
    %p117 = por %p115, %p116
    %p118 = scmp.ne.s32.totalorder %s110, %s112
    %p119 = scmp.eq.s32.totalorder %s18, 1
    %p120 = por %p118, %p119
    %p121 = scmp.ne.s32.totalorder %s112, %s113
    %p122 = scmp.eq.s32.totalorder %s18, 0
    %p123 = por %p121, %p122
    %p124 = scmp.ne.s32.totalorder %s112, %s113
    %p125 = scmp.eq.s32.totalorder %s19, 1
    %p126 = por %p124, %p125
    %p128 = scmp.ne.s32.totalorder %s113, %s127
    %p129 = scmp.eq.s32.totalorder %s19, 0
    %p130 = por %p128, %p129
    %s131 = ssub.s32 %s13, %s20
    %p132 = scmp.eq.s32.totalorder %s131, 0
    %s134 = sadd.s32 %s133, 1
    %s135 = scalar_select %p132, %s133, %s134
    %p138 = pneg %p132
    %p139 = scmp.eq.s32.totalorder %s13, 1
    %p140 = por %p138, %p139
    %p141 = scmp.ne.s32.totalorder %s133, %s136
    %p142 = scmp.eq.s32.totalorder %s13, 0
    %p143 = por %p141, %p142
    %p144 = scmp.ne.s32.totalorder %s133, %s136
    %p145 = scmp.eq.s32.totalorder %s18, 1
    %p146 = por %p144, %p145
    %p147 = scmp.ne.s32.totalorder %s136, %s137
    %p148 = scmp.eq.s32.totalorder %s18, 0
    %p149 = por %p147, %p148
    %p150 = scmp.ne.s32.totalorder %s136, %s137
    %p151 = scmp.eq.s32.totalorder %s19, 1
    %p152 = por %p150, %p151
    %p154 = scmp.ne.s32.totalorder %s137, %s153
    %p155 = scmp.eq.s32.totalorder %s19, 0
    %p156 = por %p154, %p155
    %s157 = ssub.s32 %s13, %s20
    %p158 = scmp.eq.s32.totalorder %s157, 0
    %s160 = sadd.s32 %s159, 1
    %s161 = scalar_select %p158, %s159, %s160
    %p164 = pneg %p158
    %p165 = scmp.eq.s32.totalorder %s13, 1
    %p166 = por %p164, %p165
    %p167 = scmp.ne.s32.totalorder %s159, %s162
    %p168 = scmp.eq.s32.totalorder %s13, 0
    %p169 = por %p167, %p168
    %p170 = scmp.ne.s32.totalorder %s159, %s162
    %p171 = scmp.eq.s32.totalorder %s18, 1
    %p172 = por %p170, %p171
    %p173 = scmp.ne.s32.totalorder %s162, %s163
    %p174 = scmp.eq.s32.totalorder %s18, 0
    %p175 = por %p173, %p174
    %p176 = scmp.ne.s32.totalorder %s162, %s163
    %p177 = scmp.eq.s32.totalorder %s19, 1
    %p178 = por %p176, %p177
    %p180 = scmp.ne.s32.totalorder %s163, %s179
    %p181 = scmp.eq.s32.totalorder %s19, 0
    %p182 = por %p180, %p181
    %p183 = scmp.le.s32.totalorder 1, %s13
    %p184 = scmp.lt.s32.totalorder %s13, 3
    %p185 = pnand %p183, %p184
    %p186 = pneg %p185
    // Predicated region
    $region9: #{depthwise_sep_conv_block_nhwc.4} parent=5 // pred_check
      _
    $region10: #{depthwise_sep_conv_block_nhwc.4} parent=5 // pred_check_branch
      %188 = sbr.rel (%p185) target = $region12
    $region11: #{depthwise_sep_conv_block_nhwc.4} parent=5 // pred_region
      %s189 = ssub.s32 %s13, 1
      // Predicated region
      $region13: #{depthwise_sep_conv_block_nhwc.4} parent=11 // pred_check
        %p190 = pneg %p60
      $region14: #{depthwise_sep_conv_block_nhwc.4} parent=11 // pred_check_branch
        %192 = sbr.rel (%p190) target = $region16
      $region15: #{depthwise_sep_conv_block_nhwc.4} parent=11 // pred_region
        _
      $region16: #{depthwise_sep_conv_block_nhwc.4} parent=11 // pred_fallthru
        _
      // Predicated region
      $region17: #{depthwise_sep_conv_block_nhwc.4} parent=11 // pred_check
        %p193 = pneg %p81
      $region18: #{depthwise_sep_conv_block_nhwc.4} parent=11 // pred_check_branch
        %195 = sbr.rel (%p193) target = $region20
      $region19: #{depthwise_sep_conv_block_nhwc.4} parent=11 // pred_region
        _
      $region20: #{depthwise_sep_conv_block_nhwc.4} parent=11 // pred_fallthru
        _
      // Predicated region
      $region21: #{depthwise_sep_conv_block_nhwc.4} parent=11 // pred_check
        %p196 = pneg %p102
      $region22: #{depthwise_sep_conv_block_nhwc.4} parent=11 // pred_check_branch
        %198 = sbr.rel (%p196) target = $region24
      $region23: #{depthwise_sep_conv_block_nhwc.4} parent=11 // pred_region
        _
      $region24: #{depthwise_sep_conv_block_nhwc.4} parent=11 // pred_fallthru
        _
      // Predicated region
      $region25: #{depthwise_sep_conv_block_nhwc.4} parent=11 // pred_check
        %p199 = pneg %p123
      $region26: #{depthwise_sep_conv_block_nhwc.4} parent=11 // pred_check_branch
        %201 = sbr.rel (%p199) target = $region28
      $region27: #{depthwise_sep_conv_block_nhwc.4} parent=11 // pred_region
        _
      $region28: #{depthwise_sep_conv_block_nhwc.4} parent=11 // pred_fallthru
        _
    $region12: #{depthwise_sep_conv_block_nhwc.4} parent=5 // pred_fallthru
      _
    %p202 = scmp.lt.s32.totalorder %s13, 2
    // Predicated region
    $region29: #{depthwise_sep_conv_block_nhwc.4} parent=5 // pred_check
      %p203 = pneg %p202
    $region30: #{depthwise_sep_conv_block_nhwc.4} parent=5 // pred_check_branch
      %205 = sbr.rel (%p203) target = $region32
    $region31: #{depthwise_sep_conv_block_nhwc.4} parent=5 // pred_region
      // Predicated region
      $region33: #{depthwise_sep_conv_block_nhwc.4} parent=31 // pred_check
        %p206 = pneg %p33
      $region34: #{depthwise_sep_conv_block_nhwc.4} parent=31 // pred_check_branch
        %208 = sbr.rel (%p206) target = $region36
      $region35: #{depthwise_sep_conv_block_nhwc.4} parent=31 // pred_region
        %p209 = scmp.lt.s32.totalorder %s13, 1
        %s210 = scalar_select %p209, %s13, 1
        %s211 = smul.addr %s210, 2
        %s212 = smul.addr %s211, 8
        %s213 = scalar_lea.vmem %s0, %s212
      $region36: #{depthwise_sep_conv_block_nhwc.4} parent=31 // pred_fallthru
        _
    $region32: #{depthwise_sep_conv_block_nhwc.4} parent=5 // pred_fallthru
      _
    %p214 = scmp.le.s32.totalorder 1, %s13
    %p215 = scmp.lt.s32.totalorder %s13, 3
    %p216 = pnand %p214, %p215
    %p217 = pneg %p216
    // Predicated region
    $region37: #{depthwise_sep_conv_block_nhwc.4} parent=5 // pred_check
      _
    $region38: #{depthwise_sep_conv_block_nhwc.4} parent=5 // pred_check_branch
      %219 = sbr.rel (%p216) target = $region40
    $region39: #{depthwise_sep_conv_block_nhwc.4} parent=5 // pred_region
      %s220 = ssub.s32 %s13, 1
      %p221 = scmp.lt.s32.totalorder %s18, 1
      %s222 = scalar_select %p221, %s18, 1
      %s223 = smul.addr %s222, 2
      %s224 = smul.addr %s223, 8
      %s225 = scalar_lea.vmem %s0, %s224
      %p226 = pneg %p39
      %p227 = pneg %p36
      %p228 = pneg %p60
      %p229 = pneg %p57
      %p230 = pneg %p81
      %p231 = pneg %p78
      %p232 = pneg %p102
      %p233 = pneg %p99
      %p234 = pneg %p123
      %p235 = pneg %p120
      %p236 = pneg %p149
      %p237 = pneg %p146
      %p238 = scmp.lt.s32.totalorder %s18, 1
      %s239 = scalar_select %p238, %s18, 1
      %s240 = smul.addr %s239, 2
      %s241 = smul.addr %s240, 8
      %s242 = scalar_lea.vmem %s5, %s241
      %p243 = pneg %p175
      %p244 = pneg %p172
      %p245 = scmp.lt.s32.totalorder %s18, 1
      %s246 = scalar_select %p245, %s18, 1
      %s247 = smul.addr %s246, 2
      %s248 = scalar_lea.vmem %s6, %s247
      %p249 = scmp.lt.s32.totalorder %s18, 1
      %s250 = scalar_select %p249, %s18, 1
      %s251 = smul.addr %s250, 2
      %s252 = smul.addr %s251, 8
      %s253 = scalar_lea.vmem %s0, %s252
      %p254 = scmp.lt.s32.totalorder %s18, 1
      %s255 = scalar_select %p254, %s18, 1
      %s256 = smul.addr %s255, 2
      %s257 = smul.addr %s256, 8
      %s258 = scalar_lea.vmem %s5, %s257
      %p259 = scmp.lt.s32.totalorder %s18, 1
      %s260 = scalar_select %p259, %s18, 1
      %s261 = smul.addr %s260, 2
      %s262 = scalar_lea.vmem %s6, %s261
      %v263 = vld [vmem:[%s253] sm:$0xff]
      %v264 = vld [vmem:[%s253 + $0x8] sm:$0xff]
      %v265 = vlaneseq
      %v266 = vshrl.u32 %v265, 7
      %v267 = vadd.s32 %v266, 8
      %v268 = vrot.slane %v263, 7
      %v269 = vrot.slane %v264, 7
      %vm270 = vcmp.lt.s32.totalorder %v266, 1
      %v271 = vsel %vm270, %v268, %v269
      %v272 = vsel %vm270, %v269, %v268
      %vm273 = vcmp.ge.s32.totalorder %v266, 1
      %vm274 = vcmp.ge.s32.totalorder %v267, 1
      %v275 = vsel %vm273, 1, 0
      %v276 = vsel %vm274, 1, 0
      %vm277 = vcmp.eq.s32.totalorder %v275, 1
      %vm278 = vcmp.eq.s32.totalorder %v276, 1
      %v279 = vsel %vm277, %v272, 0.0
      %v280 = vsel %vm278, %v271, 0.0
      %281 = vrot.lane.b32.xlu0 %v279, 4
      %v282 = vpop.permute.xlu0 %281
      %283 = vrot.lane.b32.xlu0 %v280, 4
      %v284 = vpop.permute.xlu0 %283
      %v285 = vld [vmem:[%s1] sm:$0x1]
      %v286 = vperm.slane %v285, 0
      %v287 = vmul.f32 %v282, %v286
      %v288 = vmul.f32 %v284, %v286
      %v289 = vadd.f32 %v287, 0.0
      %v290 = vadd.f32 %v288, 0.0
      %v291 = vld [vmem:[%s1 + $0x1] sm:$0x1]
      %v292 = vperm.slane %v291, 0
      %v293 = vmul.f32 %v279, %v292
      %v294 = vmul.f32 %v280, %v292
      %v295 = vadd.f32 %v289, %v293
      %v296 = vadd.f32 %v290, %v294
      %297 = vrot.lane.b32.xlu0 %v279, 124
      %v298 = vpop.permute.xlu0 %297
      %299 = vrot.lane.b32.xlu0 %v280, 124
      %v300 = vpop.permute.xlu0 %299
      %v301 = vld [vmem:[%s1 + $0x2] sm:$0x1]
      %v302 = vperm.slane %v301, 0
      %v303 = vmul.f32 %v298, %v302
      %v304 = vmul.f32 %v300, %v302
      %v305 = vadd.f32 %v295, %v303
      %v306 = vadd.f32 %v296, %v304
      %307 = vrot.lane.b32.xlu0 %v263, 4
      %v308 = vpop.permute.xlu0 %307
      %309 = vrot.lane.b32.xlu0 %v264, 4
      %v310 = vpop.permute.xlu0 %309
      %v311 = vld [vmem:[%s1 + $0x3] sm:$0x1]
      %v312 = vperm.slane %v311, 0
      %v313 = vmul.f32 %v308, %v312
      %v314 = vmul.f32 %v310, %v312
      %v315 = vadd.f32 %v305, %v313
      %v316 = vadd.f32 %v306, %v314
      %v317 = vld [vmem:[%s1 + $0x4] sm:$0x1]
      %v318 = vperm.slane %v317, 0
      %v319 = vmul.f32 %v263, %v318
      %v320 = vmul.f32 %v264, %v318
      %v321 = vadd.f32 %v315, %v319
      %v322 = vadd.f32 %v316, %v320
      %323 = vrot.lane.b32.xlu0 %v263, 124
      %v324 = vpop.permute.xlu0 %323
      %325 = vrot.lane.b32.xlu0 %v264, 124
      %v326 = vpop.permute.xlu0 %325
      %v327 = vld [vmem:[%s1 + $0x5] sm:$0x1]
      %v328 = vperm.slane %v327, 0
      %v329 = vmul.f32 %v324, %v328
      %v330 = vmul.f32 %v326, %v328
      %v331 = vadd.f32 %v321, %v329
      %v332 = vadd.f32 %v322, %v330
      %v333 = vrot.slane %v263, 1
      %v334 = vrot.slane %v264, 1
      %vm335 = vcmp.lt.s32.totalorder %v266, 7
      %v336 = vsel %vm335, %v333, %v334
      %v337 = vsel %vm335, %v334, %v333
      %vm338 = vcmp.le.s32.totalorder %v266, 14
      %vm339 = vcmp.le.s32.totalorder %v267, 14
      %v340 = vsel %vm338, 1, 0
      %v341 = vsel %vm339, 1, 0
      %vm342 = vcmp.eq.s32.totalorder %v340, 1
      %vm343 = vcmp.eq.s32.totalorder %v341, 1
      %v344 = vsel %vm342, %v336, 0.0
      %v345 = vsel %vm343, %v337, 0.0
      %346 = vrot.lane.b32.xlu0 %v344, 4
      %v347 = vpop.permute.xlu0 %346
      %348 = vrot.lane.b32.xlu0 %v345, 4
      %v349 = vpop.permute.xlu0 %348
      %v350 = vld [vmem:[%s1 + $0x6] sm:$0x1]
      %v351 = vperm.slane %v350, 0
      %v352 = vmul.f32 %v347, %v351
      %v353 = vmul.f32 %v349, %v351
      %v354 = vadd.f32 %v331, %v352
      %v355 = vadd.f32 %v332, %v353
      %v356 = vld [vmem:[%s1 + $0x7] sm:$0x1]
      %v357 = vperm.slane %v356, 0
      %v358 = vmul.f32 %v344, %v357
      %v359 = vmul.f32 %v345, %v357
      %v360 = vadd.f32 %v354, %v358
      %v361 = vadd.f32 %v355, %v359
      %362 = vrot.lane.b32.xlu0 %v344, 124
      %v363 = vpop.permute.xlu0 %362
      %364 = vrot.lane.b32.xlu0 %v345, 124
      %v365 = vpop.permute.xlu0 %364
      %v366 = vld [vmem:[%s1 + $0x8] sm:$0x1]
      %v367 = vperm.slane %v366, 0
      %v368 = vmul.f32 %v363, %v367
      %v369 = vmul.f32 %v365, %v367
      %v370 = vadd.f32 %v360, %v368
      %v371 = vadd.f32 %v361, %v369
      %v372 = vld [vmem:[%s2] sm:$0x1]
      %v374 = vperm.slane %v372, 0
      %v376 = vmul.f32 %v370, %v374
      %v377 = vmul.f32 %v371, %v374
      %v378 = vld [vmem:[%s3] sm:$0x1]
      %v380 = vperm.slane %v378, 0
      %v382 = vadd.f32 %v376, %v380
      %v383 = vadd.f32 %v377, %v380
      %v384 = vmax.f32 %v382, 0.0
      %v385 = vmax.f32 %v383, 0.0
      %v386 = vmin.f32 %v384, 6.0
      %v387 = vmin.f32 %v385, 6.0
      %v388 = vpack.c.bf16 %v387, %v386
      %v389 = vld [vmem:[%s4] sm:$0xf]
      %v390 = vld [vmem:[%s4 + $0x4] sm:$0xf]
      %v391 = vld [vmem:[%s4 + $0x8] sm:$0xf]
      %v392 = vld [vmem:[%s4 + $0xc] sm:$0xf]
      %v393 = vld [vmem:[%s4 + $0x10] sm:$0xf]
      %v394 = vld [vmem:[%s4 + $0x14] sm:$0xf]
      %v395 = vld [vmem:[%s4 + $0x18] sm:$0xf]
      %v396 = vld [vmem:[%s4 + $0x1c] sm:$0xf]
      %v397 = vld [vmem:[%s4 + $0x20] sm:$0xf]
      %v398 = vld [vmem:[%s4 + $0x24] sm:$0xf]
      %v399 = vld [vmem:[%s4 + $0x28] sm:$0xf]
      %v400 = vld [vmem:[%s4 + $0x2c] sm:$0xf]
      %v401 = vld [vmem:[%s4 + $0x30] sm:$0xf]
      %v402 = vld [vmem:[%s4 + $0x34] sm:$0xf]
      %v403 = vld [vmem:[%s4 + $0x38] sm:$0xf]
      %v404 = vld [vmem:[%s4 + $0x3c] sm:$0xf]
      %v421 = vunpack.c.l.b16 %v389
      %v422 = vunpack.c.l.b16 %v390
      %v423 = vunpack.c.l.b16 %v391
      %v424 = vunpack.c.l.b16 %v392
      %v425 = vunpack.c.l.b16 %v393
      %v426 = vunpack.c.l.b16 %v394
      %v427 = vunpack.c.l.b16 %v395
      %v428 = vunpack.c.l.b16 %v396
      %v429 = vunpack.c.l.b16 %v397
      %v430 = vunpack.c.l.b16 %v398
      %v431 = vunpack.c.l.b16 %v399
      %v432 = vunpack.c.l.b16 %v400
      %v433 = vunpack.c.l.b16 %v401
      %v434 = vunpack.c.l.b16 %v402
      %v435 = vunpack.c.l.b16 %v403
      %v436 = vunpack.c.l.b16 %v404
      %v437 = vpack.c.b16 %v422, %v421
      %v438 = vpack.c.b16 %v424, %v423
      %v439 = vpack.c.b16 %v426, %v425
      %v440 = vpack.c.b16 %v428, %v427
      %v441 = vpack.c.b16 %v430, %v429
      %v442 = vpack.c.b16 %v432, %v431
      %v443 = vpack.c.b16 %v434, %v433
      %v444 = vpack.c.b16 %v436, %v435
      %453 = vmatpush.bf16.msra.mxu0 %v444
      %454 = vmatpush.bf16.msra.mxu0 %v443
      %455 = vmatpush.bf16.msra.mxu0 %v442
      %456 = vmatpush.bf16.msra.mxu0 %v441
      %457 = vmatpush.bf16.msra.mxu0 %v440
      %458 = vmatpush.bf16.msra.mxu0 %v439
      %459 = vmatpush.bf16.msra.mxu0 %v438
      %460 = vmatpush.bf16.msra.mxu0 %v437
      %461 = vmatmul.bf16.gmra.mxu0 %v388
      %v462 = vpop.f32.mrf.mxu0
      %v463 = vadd.f32 0.0, %v462
      %v464 = vpop.f32.mrf.mxu0
      %v465 = vadd.f32 0.0, %v464
      %466 = vdwg.mxu0
      %467 = vst [vmem:[%s258] sm:$0xff] %v463
      %468 = vst [vmem:[%s258 + $0x8] sm:$0xff] %v465
      %v469 = vadd.f32 %v463, %v465
      %v470 = vrot.slane %v469, 4
      %v471 = vadd.f32 %v469, %v470
      %v472 = vrot.slane %v471, 2
      %v473 = vadd.f32 %v471, %v472
      %v474 = vrot.slane %v473, 1
      %v475 = vadd.f32 %v473, %v474
      %476 = vst [vmem:[%s262] sm:$0x1] %v475
      %v477 = vmul.f32 %v463, %v463
      %v478 = vmul.f32 %v465, %v465
      %v479 = vadd.f32 %v477, %v478
      %v480 = vrot.slane %v479, 4
      %v481 = vadd.f32 %v479, %v480
      %v482 = vrot.slane %v481, 2
      %v483 = vadd.f32 %v481, %v482
      %v484 = vrot.slane %v483, 1
      %v485 = vadd.f32 %v483, %v484
      %486 = vst [vmem:[%s262 + $0x1] sm:$0x1] %v485
      %p487 = scmp.lt.s32.totalorder %s18, 1
      %s488 = scalar_select %p487, %s18, 1
      %s489 = smul.addr %s488, 2
      %s490 = smul.addr %s489, 8
      %s491 = scalar_lea.vmem %s5, %s490
      %p492 = scmp.lt.s32.totalorder %s18, 1
      %s493 = scalar_select %p492, %s18, 1
      %s494 = smul.addr %s493, 2
      %s495 = scalar_lea.vmem %s6, %s494
      // Predicated region
      $region41: #{depthwise_sep_conv_block_nhwc.4} parent=39 // pred_check
        %p496 = pneg %p146
      $region42: #{depthwise_sep_conv_block_nhwc.4} parent=39 // pred_check_branch
        %498 = sbr.rel (%p496) target = $region44
      $region43: #{depthwise_sep_conv_block_nhwc.4} parent=39 // pred_region
        _
      $region44: #{depthwise_sep_conv_block_nhwc.4} parent=39 // pred_fallthru
        _
      // Predicated region
      $region45: #{depthwise_sep_conv_block_nhwc.4} parent=39 // pred_check
        %p499 = pneg %p172
      $region46: #{depthwise_sep_conv_block_nhwc.4} parent=39 // pred_check_branch
        %501 = sbr.rel (%p499) target = $region48
      $region47: #{depthwise_sep_conv_block_nhwc.4} parent=39 // pred_region
        _
      $region48: #{depthwise_sep_conv_block_nhwc.4} parent=39 // pred_fallthru
        _
    $region40: #{depthwise_sep_conv_block_nhwc.4} parent=5 // pred_fallthru
      _
    %p502 = scmp.le.s32.totalorder 2, %s13
    // Predicated region
    $region49: #{depthwise_sep_conv_block_nhwc.4} parent=5 // pred_check
      %p503 = pneg %p502
    $region50: #{depthwise_sep_conv_block_nhwc.4} parent=5 // pred_check_branch
      %505 = sbr.rel (%p503) target = $region52
    $region51: #{depthwise_sep_conv_block_nhwc.4} parent=5 // pred_region
      %s506 = ssub.s32 %s13, 2
      // Predicated region
      $region53: #{depthwise_sep_conv_block_nhwc.4} parent=51 // pred_check
        %p507 = pneg %p152
      $region54: #{depthwise_sep_conv_block_nhwc.4} parent=51 // pred_check_branch
        %509 = sbr.rel (%p507) target = $region56
      $region55: #{depthwise_sep_conv_block_nhwc.4} parent=51 // pred_region
        %p510 = scmp.lt.s32.totalorder %s19, 1
        %s511 = scalar_select %p510, %s19, 1
        %s512 = smul.addr %s511, 2
        %s513 = smul.addr %s512, 8
        %s514 = scalar_lea.vmem %s5, %s513
      $region56: #{depthwise_sep_conv_block_nhwc.4} parent=51 // pred_fallthru
        _
      // Predicated region
      $region57: #{depthwise_sep_conv_block_nhwc.4} parent=51 // pred_check
        %p515 = pneg %p178
      $region58: #{depthwise_sep_conv_block_nhwc.4} parent=51 // pred_check_branch
        %517 = sbr.rel (%p515) target = $region60
      $region59: #{depthwise_sep_conv_block_nhwc.4} parent=51 // pred_region
        %p518 = scmp.lt.s32.totalorder %s19, 1
        %s519 = scalar_select %p518, %s19, 1
        %s520 = smul.addr %s519, 2
        %s521 = scalar_lea.vmem %s6, %s520
      $region60: #{depthwise_sep_conv_block_nhwc.4} parent=51 // pred_fallthru
        _
    $region52: #{depthwise_sep_conv_block_nhwc.4} parent=5 // pred_fallthru
      _
  $region6: #{depthwise_sep_conv_block_nhwc.4} parent=0 // loop_footer
    %s17 = sadd.s32 1, %s13
  $region7: #{depthwise_sep_conv_block_nhwc.4} parent=0 // loop_footer_branch
    %12 = sbr.rel target = $region3
  $region8: #{depthwise_sep_conv_block_nhwc.4} parent=0 // loop_exit
    _

</llo_original>
